<compile_context>
chip_gen: v5e
topology: v5e:2x2
jax: 0.10.0
libtpu: 0.0.40
codegen_flags: <defaults>
</compile_context>

<pallas_src>
import math
from functools import partial

import numpy as np
import jax
import jax.numpy as jnp
from jax.experimental import pallas as pl
from jax.experimental.pallas import tpu as pltpu


# -----------------------------------------------------------------------------
# Pallas kernel: one FPN level, grid over batch
# -----------------------------------------------------------------------------
def _rpn_level_kernel(H, W, C, A, stride,
                      mask_ref, x_ref, w3t_ref, b3_ref,
                      wcat_ref, bcat_ref, scale_ref, out_ref):
    """Fused RPN head for one batch element, channels-major / lane-dense.

    x_ref     : (1, C, H*W)     input slab (NCHW flattened, HW on lanes)
    mask_ref  : (2, H*W)        horizontal tap-validity masks [w-1 ok, w+1 ok]
    w3t_ref   : (C, 9*C)        3x3 conv weight in transposed im2col layout
    b3_ref    : (C, 1)          conv bias
    wcat_ref  : (C+A+4, C)      fused 1x1 heads [proposal_feats; logits; deltas]
    bcat_ref  : (C+A+4, 1)      fused head bias
    scale_ref : (1,) f32 SMEM   per-level Scale parameter
    out_ref   : (1, C+A+4, HW)  packed lane-dense output slab
    """
    HW = H * W
    P = C + A + 4

    x = x_ref[...][0]                      # (C, HW)
    m = mask_ref[...]                      # (2, HW)

    # --- im2col on the flattened slab -------------------------------------
    # Zero-pad W+1 lanes on each side; tap (ky, kx) is then the static window
    # xp[:, ky*W + kx : ky*W + kx + HW].  The vertical halo is absorbed by the
    # zero pad; the horizontal halo is zeroed by the two precomputed masks.
    # This keeps the shift work on the lane path (no per-tap reshape relayouts).
    zpad = jnp.zeros((C, W + 1), x.dtype)
    xp = jnp.concatenate([zpad, x, zpad], axis=1)      # (C, HW + 2W + 2)
    taps = []
    for ky in range(3):
        for kx in range(3):
            off = ky * W + kx
            tap = xp[:, off:off + HW]
            if kx == 0:                    # reads w-1: invalid at w == 0
                tap = tap * m[0:1, :]
            elif kx == 2:                  # reads w+1: invalid at w == W-1
                tap = tap * m[1:2, :]
            taps.append(tap)
    col = jnp.concatenate(taps, axis=0)    # (9C, HW)

    # --- shared 3x3 conv (pad=1) + ReLU: one deep-K (K=9C) MXU matmul ------
    # (f32 kept for strict parity check; production would feed bf16 to the MXU)
    t = jnp.dot(w3t_ref[...], col, preferred_element_type=jnp.float32)
    t = jnp.maximum(t + b3_ref[...], 0.0)  # (C, HW)

    # --- fused 1x1 heads in one matmul -------------------------------------
    # rows [0:C) proposal feats, [C:C+A) objectness logits, [C+A:P) deltas
    y = jnp.dot(wcat_ref[...], t,
                preferred_element_type=jnp.float32) + bcat_ref[...]

    # anchor deltas: Scale -> ReLU -> * fpn_stride (delta rows only)
    d = jnp.maximum(y * scale_ref[0], 0.0) * float(stride)
    row = jax.lax.broadcasted_iota(jnp.int32, (P, HW), 0)
    out_ref[...] = jnp.where(row >= C + A, d, y)[None]


# -----------------------------------------------------------------------------
# Wrapper helpers
# -----------------------------------------------------------------------------
def _edge_masks(H, W):
    """(2, H*W) masks: row 0 -> (w-1) in range, row 1 -> (w+1) in range."""
    w = np.arange(H * W) % W
    return jnp.asarray(np.stack([(w >= 1), (w <= W - 2)]).astype(np.float32))


def pack_params(params, A):
    """Pre-pack weights for the fused kernel (done once, outside the kernel)."""
    (w3, b3, wobj, bobj, wfeat, bfeat, wdel, bdel, scales) = params
    C = w3.shape[2]
    w3t = jnp.transpose(w3.reshape(9 * C, C))                  # (C, 9C)
    b3c = b3.reshape(C, 1)
    wcat = jnp.concatenate([wfeat.T, wobj.T, wdel.T], axis=0)  # (C+A+4, C)
    bcat = jnp.concatenate([bfeat, bobj, bdel]).reshape(-1, 1)
    return w3t, b3c, wcat, bcat, scales


def rpn_head_level(x_nchw, packed, level, stride, A):
    """Run the fused RPN head on one FPN level (NCHW input).

    Returns (logits, feats, deltas) with shapes (N, H*W, A/C/4), h-slow/w-fast.
    """
    N, C, H, W = x_nchw.shape
    HW = H * W
    P = C + A + 4
    w3t, b3c, wcat, bcat, scales = packed

    x_flat = x_nchw.reshape(N, C, HW)        # free bitcast, stays channels-major
    masks = _edge_masks(H, W)

    kern = partial(_rpn_level_kernel, H, W, C, A, stride)

    def full(shape):
        return pl.BlockSpec(shape, lambda n: (0,) * len(shape))

    out = pl.pallas_call(
        kern,
        out_shape=jax.ShapeDtypeStruct((N, P, HW), jnp.float32),
        grid=(N,),
        in_specs=[
            full((2, HW)),                                      # edge masks
            pl.BlockSpec((1, C, HW), lambda n: (n, 0, 0)),      # input slab
            full((C, 9 * C)),                                   # conv weight^T
            full((C, 1)),                                       # conv bias
            full((P, C)),                                       # fused heads^T
            full((P, 1)),                                       # fused head bias
            pl.BlockSpec(memory_space=pltpu.MemorySpace.SMEM),  # per-level Scale
        ],
        out_specs=pl.BlockSpec((1, P, HW), lambda n: (n, 0, 0)),
        compiler_params=pltpu.CompilerParams(
            dimension_semantics=("parallel",)),                 # v7x: 2 TCs
    )(masks, x_flat, w3t, b3c, wcat, bcat, scales[level])

    # cheap layout plumbing back to the PyTorch (N, H*W, C_out) convention
    y = jnp.transpose(out, (0, 2, 1))        # (N, HW, P)
    feats = y[..., :C]
    logits = y[..., C:C + A]
    deltas = y[..., C + A:]
    return logits, feats, deltas


def compute_locations(H, W, stride):
    """Mirror of QGN.compute_locations_per_level: (H*W, 2), h slow / w fast."""
    shifts_x = jnp.arange(0, W * stride, stride, dtype=jnp.float32)
    shifts_y = jnp.arange(0, H * stride, stride, dtype=jnp.float32)
    sy, sx = jnp.meshgrid(shifts_y, shifts_x, indexing="ij")
    return jnp.stack([sx.reshape(-1), sy.reshape(-1)], axis=1) + stride // 2


def apply_deltas(deltas, loc):
    """deltas = (dl, dt, dr, db); boxes = [x - dl, y - dt, x + dr, y + db]."""
    return jnp.concatenate([loc - deltas[..., :2], loc + deltas[..., 2:]],
                           axis=-1)


# -----------------------------------------------------------------------------
# QGN forward (inference path: simple_predict_proposals)
# -----------------------------------------------------------------------------
def qgn_forward(features_nchw, params, fpn_strides, num_classes, max_det):
    """features_nchw: list of (N, C, H, W) arrays (PyTorch layout)."""
    A = num_classes
    packed = pack_params(params, A)

    # TODO(synk): the FPN levels could be fused into a single pallas_call via
    # scalar-prefetched per-level offsets; kept as one call per level here.
    logits_all, feats_all, deltas_all, boxes_all = [], [], [], []
    for level, x in enumerate(features_nchw):
        N, C, H, W = x.shape
        lg, ft, dl = rpn_head_level(x, packed, level, fpn_strides[level], A)
        loc = compute_locations(H, W, fpn_strides[level])
        bx = apply_deltas(dl, loc[None])
        logits_all.append(lg)
        feats_all.append(ft)
        deltas_all.append(dl)
        boxes_all.append(bx)

    logits = jnp.concatenate(logits_all, axis=1)   # (N, R, A)
    feats = jnp.concatenate(feats_all, axis=1)     # (N, R, C)
    deltas = jnp.concatenate(deltas_all, axis=1)   # (N, R, 4)
    boxes = jnp.concatenate(boxes_all, axis=1)     # (N, R, 4)

    # simple_predict_proposals: argsort(descending) of raw logits, keep top-k.
    N = logits.shape[0]
    scores_all = logits.reshape(N, -1)             # (N, R*A); A == 1 here
    topv, topi = jax.lax.top_k(scores_all, max_det)
    prop_boxes = jnp.take_along_axis(boxes, topi[..., None], axis=1)
    prop_feats = jnp.take_along_axis(feats, topi[..., None], axis=1)

    # TODO(synk): training path (Hungarian matching via linear_sum_assignment,
    # focal / GIoU losses) has no Pallas equivalent and is omitted.
    losses = {}
    proposals = {"proposal_boxes": prop_boxes,
                 "proposal_feats": prop_feats,
                 "objectness_logits": topv}
    return proposals, losses, (logits, feats, deltas, boxes)


# -----------------------------------------------------------------------------
# Pure-JAX reference of one level (for correctness check)
# -----------------------------------------------------------------------------
def ref_level(x_nchw, params, level, stride, A):
    (w3, b3, wobj, bobj, wfeat, bfeat, wdel, bdel, scales) = params
    x_nhwc = jnp.transpose(x_nchw, (0, 2, 3, 1))
    t = jax.lax.conv_general_dilated(
        x_nhwc, w3, (1, 1), "SAME",
        dimension_numbers=("NHWC", "HWIO", "NHWC")) + b3
    t = jax.nn.relu(t)
    N, H, W, C = x_nhwc.shape
    logits = jnp.einsum("nhwc,ca->nhwa", t, wobj) + bobj
    feats = jnp.einsum("nhwc,cd->nhwd", t, wfeat) + bfeat
    d = (jnp.einsum("nhwc,cd->nhwd", t, wdel) + bdel) * scales[level][0]
    d = jax.nn.relu(d) * stride
    return (logits.reshape(N, H * W, A),
            feats.reshape(N, H * W, C),
            d.reshape(N, H * W, 4))


# -----------------------------------------------------------------------------
# Main
# -----------------------------------------------------------------------------
if __name__ == "__main__":
    N, C = 2, 32
    num_classes = 1            # QueryRCNN RPN num_classes (A)
    box_dim = 4
    fpn_strides = [8, 16]
    level_hw = [(16, 32), (8, 16)]     # e.g. a 128x256 image at strides 8/16
    max_det = 10

    key = jax.random.PRNGKey(0)
    ks = jax.random.split(key, 8)

    # Deterministic parameter init mirroring StaRPNHead.__init__ shapes.
    w3 = 0.01 * jax.random.normal(ks[0], (3, 3, C, C), jnp.float32)   # HWIO
    b3 = jnp.zeros((C,), jnp.float32)
    wobj = 0.01 * jax.random.normal(ks[1], (C, num_classes), jnp.float32)
    bobj = jnp.full((num_classes,), -math.log((1 - 0.01) / 0.01), jnp.float32)
    wfeat = 0.02 * jax.random.normal(ks[2], (C, C), jnp.float32)
    bfeat = 0.01 * jax.random.normal(ks[3], (C,), jnp.float32)
    wdel = 0.01 * jax.random.normal(ks[4], (C, box_dim), jnp.float32)
    bdel = jnp.zeros((box_dim,), jnp.float32)
    scales = [jnp.array([1.0], jnp.float32) for _ in fpn_strides]
    params = (w3, b3, wobj, bobj, wfeat, bfeat, wdel, bdel, scales)

    # Synthetic multi-level features, PyTorch NCHW layout.
    features = []
    for lvl, (H, W) in enumerate(level_hw):
        features.append(
            jax.random.normal(jax.random.fold_in(ks[5], lvl),
                              (N, C, H, W), jnp.float32))

    proposals, losses, (logits, feats, deltas, boxes) = qgn_forward(
        features, params, fpn_strides, num_classes, max_det)
    jax.block_until_ready(proposals["proposal_boxes"])
    jax.block_until_ready(proposals["proposal_feats"])

    # ---- correctness check of the kernel hot path (all levels) --------------
    packed = pack_params(params, num_classes)
    tol = dict(atol=2e-3, rtol=2e-3)
    off = 0
    for lvl, (H, W) in enumerate(level_hw):
        s = fpn_strides[lvl]
        lg_k, ft_k, dl_k = rpn_head_level(features[lvl], packed, lvl, s,
                                          num_classes)
        lg_r, ft_r, dl_r = ref_level(features[lvl], params, lvl, s,
                                     num_classes)
        assert jnp.allclose(lg_k, lg_r, **tol), f"logits mismatch, level {lvl}"
        assert jnp.allclose(ft_k, ft_r, **tol), f"feats mismatch, level {lvl}"
        assert jnp.allclose(dl_k, dl_r, **tol), f"deltas mismatch, level {lvl}"

        # decoded boxes vs. an independently built (numpy loop) location grid
        loc_np = np.array([[w * s + s // 2, h * s + s // 2]
                           for h in range(H) for w in range(W)], np.float32)
        dl_r_np = np.asarray(dl_r)
        bx_r = np.concatenate([loc_np[None] - dl_r_np[..., :2],
                               loc_np[None] + dl_r_np[..., 2:]], axis=-1)
        HW = H * W
        bx_k = boxes[:, off:off + HW]
        assert jnp.allclose(bx_k, jnp.asarray(bx_r), **tol), \
            f"boxes mismatch, level {lvl}"
        off += HW

    print("KERNEL_OK")
</pallas_src>

<mosaic_0001>
module attributes {stable_mosaic.version = 11 : i64} {
  func.func @_rpn_level_kernel(%arg0: i32, %arg1: memref<2x512xf32, #tpu.memory_space<vmem>>, %arg2: memref<1x32x512xf32, #tpu.memory_space<vmem>>, %arg3: memref<32x288xf32, #tpu.memory_space<vmem>>, %arg4: memref<32x1xf32, #tpu.memory_space<vmem>>, %arg5: memref<37x32xf32, #tpu.memory_space<vmem>>, %arg6: memref<37x1xf32, #tpu.memory_space<vmem>>, %arg7: memref<1xf32, #tpu.memory_space<smem>>, %arg8: memref<1x37x512xf32, #tpu.memory_space<vmem>>) attributes {dimension_semantics = [#tpu.dimension_semantics<parallel>], iteration_bounds = array<i64: 2>, scalar_prefetch = 0 : i64, scratch_operands = 0 : i64, tpu.core_type = #tpu.core_type<tc>, window_params = [{pipeline_mode = #tpu.pipeline_mode<synchronous>, transform_indices = @transform_0, window_bounds = array<i64: 2, 512>}, {transform_indices = @transform_1, window_bounds = array<i64: 1, 32, 512>}, {pipeline_mode = #tpu.pipeline_mode<synchronous>, transform_indices = @transform_2, window_bounds = array<i64: 32, 288>}, {pipeline_mode = #tpu.pipeline_mode<synchronous>, transform_indices = @transform_3, window_bounds = array<i64: 32, 1>}, {pipeline_mode = #tpu.pipeline_mode<synchronous>, transform_indices = @transform_4, window_bounds = array<i64: 37, 32>}, {pipeline_mode = #tpu.pipeline_mode<synchronous>, transform_indices = @transform_5, window_bounds = array<i64: 37, 1>}, {transform_indices = @transform_6, window_bounds = array<i64: 1>}, {transform_indices = @transform_7, window_bounds = array<i64: 1, 37, 512>}]} {
    %c0 = arith.constant 0 : index
    %c0_0 = arith.constant 0 : index
    %c0_1 = arith.constant 0 : index
    %0 = vector.load %arg2[%c0, %c0_0, %c0_1] : memref<1x32x512xf32, #tpu.memory_space<vmem>>, vector<1x32x512xf32>
    %1 = vector.shape_cast %0 : vector<1x32x512xf32> to vector<32x512xf32>
    %c0_2 = arith.constant 0 : index
    %c0_3 = arith.constant 0 : index
    %2 = vector.load %arg1[%c0_2, %c0_3] : memref<2x512xf32, #tpu.memory_space<vmem>>, vector<2x512xf32>
    %cst = arith.constant 0.000000e+00 : f32
    %3 = vector.broadcast %cst : f32 to vector<32x33xf32>
    %4 = tpu.concatenate %3, %1, %3 in 1 : vector<32x33xf32>, vector<32x512xf32>, vector<32x33xf32> -> vector<32x578xf32>
    %5 = vector.extract_strided_slice %4 {offsets = [0, 0], sizes = [32, 512], strides = [1, 1]} : vector<32x578xf32> to vector<32x512xf32>
    %6 = vector.extract_strided_slice %2 {offsets = [0, 0], sizes = [1, 512], strides = [1, 1]} : vector<2x512xf32> to vector<1x512xf32>
    %7 = vector.broadcast %6 : vector<1x512xf32> to vector<32x512xf32>
    %8 = arith.mulf %5, %7 : vector<32x512xf32>
    %9 = vector.extract_strided_slice %4 {offsets = [0, 1], sizes = [32, 512], strides = [1, 1]} : vector<32x578xf32> to vector<32x512xf32>
    %10 = vector.extract_strided_slice %4 {offsets = [0, 2], sizes = [32, 512], strides = [1, 1]} : vector<32x578xf32> to vector<32x512xf32>
    %11 = vector.extract_strided_slice %2 {offsets = [1, 0], sizes = [1, 512], strides = [1, 1]} : vector<2x512xf32> to vector<1x512xf32>
    %12 = vector.broadcast %11 : vector<1x512xf32> to vector<32x512xf32>
    %13 = arith.mulf %10, %12 : vector<32x512xf32>
    %14 = vector.extract_strided_slice %4 {offsets = [0, 32], sizes = [32, 512], strides = [1, 1]} : vector<32x578xf32> to vector<32x512xf32>
    %15 = vector.extract_strided_slice %2 {offsets = [0, 0], sizes = [1, 512], strides = [1, 1]} : vector<2x512xf32> to vector<1x512xf32>
    %16 = vector.broadcast %15 : vector<1x512xf32> to vector<32x512xf32>
    %17 = arith.mulf %14, %16 : vector<32x512xf32>
    %18 = vector.extract_strided_slice %4 {offsets = [0, 33], sizes = [32, 512], strides = [1, 1]} : vector<32x578xf32> to vector<32x512xf32>
    %19 = vector.extract_strided_slice %4 {offsets = [0, 34], sizes = [32, 512], strides = [1, 1]} : vector<32x578xf32> to vector<32x512xf32>
    %20 = vector.extract_strided_slice %2 {offsets = [1, 0], sizes = [1, 512], strides = [1, 1]} : vector<2x512xf32> to vector<1x512xf32>
    %21 = vector.broadcast %20 : vector<1x512xf32> to vector<32x512xf32>
    %22 = arith.mulf %19, %21 : vector<32x512xf32>
    %23 = vector.extract_strided_slice %4 {offsets = [0, 64], sizes = [32, 512], strides = [1, 1]} : vector<32x578xf32> to vector<32x512xf32>
    %24 = vector.extract_strided_slice %2 {offsets = [0, 0], sizes = [1, 512], strides = [1, 1]} : vector<2x512xf32> to vector<1x512xf32>
    %25 = vector.broadcast %24 : vector<1x512xf32> to vector<32x512xf32>
    %26 = arith.mulf %23, %25 : vector<32x512xf32>
    %27 = vector.extract_strided_slice %4 {offsets = [0, 65], sizes = [32, 512], strides = [1, 1]} : vector<32x578xf32> to vector<32x512xf32>
    %28 = vector.extract_strided_slice %4 {offsets = [0, 66], sizes = [32, 512], strides = [1, 1]} : vector<32x578xf32> to vector<32x512xf32>
    %29 = vector.extract_strided_slice %2 {offsets = [1, 0], sizes = [1, 512], strides = [1, 1]} : vector<2x512xf32> to vector<1x512xf32>
    %30 = vector.broadcast %29 : vector<1x512xf32> to vector<32x512xf32>
    %31 = arith.mulf %28, %30 : vector<32x512xf32>
    %32 = tpu.concatenate %8, %9, %13, %17, %18, %22, %26, %27, %31 in 0 : vector<32x512xf32>, vector<32x512xf32>, vector<32x512xf32>, vector<32x512xf32>, vector<32x512xf32>, vector<32x512xf32>, vector<32x512xf32>, vector<32x512xf32>, vector<32x512xf32> -> vector<288x512xf32>
    %c0_4 = arith.constant 0 : index
    %c0_5 = arith.constant 0 : index
    %33 = vector.load %arg3[%c0_4, %c0_5] : memref<32x288xf32, #tpu.memory_space<vmem>>, vector<32x288xf32>
    %cst_6 = arith.constant dense<0.000000e+00> : vector<32x512xf32>
    %34 = tpu.matmul %33, %32, %cst_6 {dimension_numbers = #tpu.dot_dimension_numbers<[1], [0], [0], [1], [0, 0, 1, 1], [], []>} : vector<32x288xf32>, vector<288x512xf32>, vector<32x512xf32> -> vector<32x512xf32>
    %c0_7 = arith.constant 0 : index
    %c0_8 = arith.constant 0 : index
    %35 = vector.load %arg4[%c0_7, %c0_8] : memref<32x1xf32, #tpu.memory_space<vmem>>, vector<32x1xf32>
    %36 = vector.broadcast %35 : vector<32x1xf32> to vector<32x512xf32>
    %37 = arith.addf %34, %36 : vector<32x512xf32>
    %cst_9 = arith.constant 0.000000e+00 : f32
    %38 = vector.broadcast %cst_9 : f32 to vector<32x512xf32>
    %39 = arith.maximumf %37, %38 : vector<32x512xf32>
    %c0_10 = arith.constant 0 : index
    %c0_11 = arith.constant 0 : index
    %40 = vector.load %arg5[%c0_10, %c0_11] : memref<37x32xf32, #tpu.memory_space<vmem>>, vector<37x32xf32>
    %cst_12 = arith.constant dense<0.000000e+00> : vector<37x512xf32>
    %41 = tpu.matmul %40, %39, %cst_12 {dimension_numbers = #tpu.dot_dimension_numbers<[1], [0], [0], [1], [0, 0, 1, 1], [], []>} : vector<37x32xf32>, vector<32x512xf32>, vector<37x512xf32> -> vector<37x512xf32>
    %c0_13 = arith.constant 0 : index
    %c0_14 = arith.constant 0 : index
    %42 = vector.load %arg6[%c0_13, %c0_14] : memref<37x1xf32, #tpu.memory_space<vmem>>, vector<37x1xf32>
    %43 = vector.broadcast %42 : vector<37x1xf32> to vector<37x512xf32>
    %44 = arith.addf %41, %43 : vector<37x512xf32>
    %c0_15 = arith.constant 0 : index
    %45 = memref.load %arg7[%c0_15] : memref<1xf32, #tpu.memory_space<smem>>
    %46 = vector.broadcast %45 : f32 to vector<37x512xf32>
    %47 = arith.mulf %44, %46 : vector<37x512xf32>
    %cst_16 = arith.constant 0.000000e+00 : f32
    %48 = vector.broadcast %cst_16 : f32 to vector<37x512xf32>
    %49 = arith.maximumf %47, %48 : vector<37x512xf32>
    %cst_17 = arith.constant 8.000000e+00 : f32
    %50 = vector.broadcast %cst_17 : f32 to vector<37x512xf32>
    %51 = arith.mulf %49, %50 : vector<37x512xf32>
    %52 = tpu.iota {dimensions = array<i32: 0>} : vector<37x512xi32>
    %c33_i32 = arith.constant 33 : i32
    %53 = vector.broadcast %c33_i32 : i32 to vector<37x512xi32>
    %54 = arith.cmpi sge, %52, %53 : vector<37x512xi32>
    %55 = arith.select %54, %51, %44 : vector<37x512xi1>, vector<37x512xf32>
    %56 = vector.shape_cast %55 : vector<37x512xf32> to vector<1x37x512xf32>
    %c0_18 = arith.constant 0 : index
    %c0_19 = arith.constant 0 : index
    %c0_20 = arith.constant 0 : index
    %57 = vector.load %arg8[%c0_18, %c0_19, %c0_20] : memref<1x37x512xf32, #tpu.memory_space<vmem>>, vector<1x37x512xf32>
    tpu.vector_store %arg8[%c0_18, %c0_19, %c0_20], %56 {strides = array<i32>} : memref<1x37x512xf32, #tpu.memory_space<vmem>>, vector<1x37x512xf32>,
    return
  }
  func.func @transform_0(%arg0: i32) -> (i32, i32) {
    %c0_i32 = arith.constant 0 : i32
    %c0_i32_0 = arith.constant 0 : i32
    %c0_i32_1 = arith.constant 0 : i32
    return %c0_i32, %c0_i32_0 : i32, i32
  }
  func.func @transform_1(%arg0: i32) -> (i32, i32, i32) {
    %c0_i32 = arith.constant 0 : i32
    %c0_i32_0 = arith.constant 0 : i32
    %c0_i32_1 = arith.constant 0 : i32
    return %arg0, %c0_i32, %c0_i32_0 : i32, i32, i32
  }
  func.func @transform_2(%arg0: i32) -> (i32, i32) {
    %c0_i32 = arith.constant 0 : i32
    %c0_i32_0 = arith.constant 0 : i32
    %c0_i32_1 = arith.constant 0 : i32
    return %c0_i32, %c0_i32_0 : i32, i32
  }
  func.func @transform_3(%arg0: i32) -> (i32, i32) {
    %c0_i32 = arith.constant 0 : i32
    %c0_i32_0 = arith.constant 0 : i32
    %c0_i32_1 = arith.constant 0 : i32
    return %c0_i32, %c0_i32_0 : i32, i32
  }
  func.func @transform_4(%arg0: i32) -> (i32, i32) {
    %c0_i32 = arith.constant 0 : i32
    %c0_i32_0 = arith.constant 0 : i32
    %c0_i32_1 = arith.constant 0 : i32
    return %c0_i32, %c0_i32_0 : i32, i32
  }
  func.func @transform_5(%arg0: i32) -> (i32, i32) {
    %c0_i32 = arith.constant 0 : i32
    %c0_i32_0 = arith.constant 0 : i32
    %c0_i32_1 = arith.constant 0 : i32
    return %c0_i32, %c0_i32_0 : i32, i32
  }
  func.func @transform_6(%arg0: i32) -> i32 {
    %c0_i32 = arith.constant 0 : i32
    %c0_i32_0 = arith.constant 0 : i32
    return %c0_i32 : i32
  }
  func.func @transform_7(%arg0: i32) -> (i32, i32, i32) {
    %c0_i32 = arith.constant 0 : i32
    %c0_i32_0 = arith.constant 0 : i32
    %c0_i32_1 = arith.constant 0 : i32
    return %arg0, %c0_i32, %c0_i32_0 : i32, i32, i32
  }
}

</mosaic_0001>

<llo_original>
// kernel: tpu_custom_call.1
$region0: #{tpu_custom_call.1}
  #allocation0 [shape = 'u32[]', space=smem, size = 0x4, offset = 0x4, fixed_abs, tag = 'smem constant byte address 0x4 - core index']
  #allocation1 [shape = 'u32[72,128]{1,0:T(1,128)}', space=vmem, size = 0x9000, scoped, tag = 'internal scratch']
  #allocation2 [shape = 'f32[1]{0:T(128)S(6)}', space=smem, size = 0x200, scoped, tag = 'scoped memory for tpu_custom_call.1']
  %s0 = inlined_call_operand.vmem [shape: f32[2,512], index: 0, kind: input, shape index: {}]
  %s1 = inlined_call_operand.hbm [shape: f32[2,32,512], index: 1, kind: input, shape index: {}]
  %s2 = inlined_call_operand.vmem [shape: f32[32,288], index: 2, kind: input, shape index: {}]
  %s3 = inlined_call_operand.vmem [shape: f32[32,1], index: 3, kind: input, shape index: {}]
  %s4 = inlined_call_operand.vmem [shape: f32[37,32], index: 4, kind: input, shape index: {}]
  %s5 = inlined_call_operand.vmem [shape: f32[37,1], index: 5, kind: input, shape index: {}]
  %s6 = inlined_call_operand.<no memory space> [shape: f32[1], index: 6, kind: input, shape index: {}]
  %s7 = inlined_call_operand.vmem [shape: f32[2,37,512], index: 7, kind: output, shape index: {}]
  %s8 = sld [smem:[#allocation0]]
  $region65: #{tpu_custom_call.1} parent=0
    _
  %s10 = ssub.s32 1, %s8
  %s11 = scalar_select 0, %s10, %s8
  %12 = sst [smem:[#allocation2]] %s6
  $region1: #{tpu_custom_call.1} parent=0
    #allocation3 [shape = 'u8[131072]{0}', space=vmem, size = 0x20000, scoped, tag = 'input window, operand 1']
    #allocation4 [shape = 's32[2]{0}', space=sflag, size = 0x8, scoped, tag = 'scoped memory for tpu_custom_call.1']
    %13 = vsyncpa [#allocation4], 0
    %s14 = scalar_lea.sflag [#allocation4], 1
    %15 = vsyncpa %s14, 0
    loop: start=0, step=1, limit=4
    $region2: #{tpu_custom_call.1} parent=1 // loop_pre_header
      _
    $region3: #{tpu_custom_call.1} parent=1 // loop_header
      %s17 = sphi 0, %s21
      %p18 = scmp.ge.s32.totalorder %s17, 4
      %s25 = sphi 0, %s25
      %s27 = sphi 0, %s25
      %s28 = sphi 0, %s27
      %s42 = sphi 0, %s28
      %s48 = sphi 0, %s50
      %s51 = sphi 0, %s48
      %s52 = sphi 0, %s51
      %s68 = sphi 0, %s52
      %s72 = sphi 0, %s72
      %s74 = sphi 0, %s72
      %s75 = sphi 0, %s74
      %s89 = sphi 0, %s75
      %s93 = sphi 0, %s93
      %s95 = sphi 0, %s93
      %s96 = sphi 0, %s95
      %s110 = sphi 0, %s96
      %s114 = sphi 0, %s114
      %s116 = sphi 0, %s114
      %s117 = sphi 0, %s116
      %s131 = sphi 0, %s117
      %s135 = sphi 0, %s135
      %s137 = sphi 0, %s135
      %s138 = sphi 0, %s137
      %s152 = sphi 0, %s138
      %s156 = sphi 0, %s156
      %s158 = sphi 0, %s156
      %s159 = sphi 0, %s158
      %s173 = sphi 0, %s159
      %s179 = sphi 0, %s181
      %s182 = sphi 0, %s179
      %s183 = sphi 0, %s182
      %s199 = sphi 0, %s183
    $region4: #{tpu_custom_call.1} parent=1 // loop_header_branch
      %20 = sbr.rel (%p18) target = $region8
    $region5: #{tpu_custom_call.1} parent=1 // loop_body
      %s22 = ssub.s32 %s17, 1
      %s23 = ssub.s32 %s17, 2
      %s24 = sadd.s32 %s17, 1
      %s26 = sadd.s32 %s25, 1
      %p29 = scmp.eq.s32.totalorder %s17, 1
      %p30 = scmp.ne.s32.totalorder %s25, %s27
      %p31 = scmp.eq.s32.totalorder %s17, 0
      %p32 = por %p30, %p31
      %p33 = scmp.ne.s32.totalorder %s25, %s27
      %p34 = scmp.eq.s32.totalorder %s22, 1
      %p35 = por %p33, %p34
      %p36 = scmp.ne.s32.totalorder %s27, %s28
      %p37 = scmp.eq.s32.totalorder %s22, 0
      %p38 = por %p36, %p37
      %p39 = scmp.ne.s32.totalorder %s27, %s28
      %p40 = scmp.eq.s32.totalorder %s23, 1
      %p41 = por %p39, %p40
      %p43 = scmp.ne.s32.totalorder %s28, %s42
      %p44 = scmp.eq.s32.totalorder %s23, 0
      %p45 = por %p43, %p44
      %s46 = ssub.s32 %s17, %s24
      %p47 = scmp.eq.s32.totalorder %s46, 0
      %s49 = sadd.s32 %s48, 1
      %s50 = scalar_select %p47, %s48, %s49
      %p53 = pneg %p47
      %p54 = scmp.eq.s32.totalorder %s17, 1
      %p55 = por %p53, %p54
      %p56 = scmp.ne.s32.totalorder %s48, %s51
      %p57 = scmp.eq.s32.totalorder %s17, 0
      %p58 = por %p56, %p57
      %p59 = scmp.ne.s32.totalorder %s48, %s51
      %p60 = scmp.eq.s32.totalorder %s22, 1
      %p61 = por %p59, %p60
      %p62 = scmp.ne.s32.totalorder %s51, %s52
      %p63 = scmp.eq.s32.totalorder %s22, 0
      %p64 = por %p62, %p63
      %p65 = scmp.ne.s32.totalorder %s51, %s52
      %p66 = scmp.eq.s32.totalorder %s23, 1
      %p67 = por %p65, %p66
      %p69 = scmp.ne.s32.totalorder %s52, %s68
      %p70 = scmp.eq.s32.totalorder %s23, 0
      %p71 = por %p69, %p70
      %s73 = sadd.s32 %s72, 1
      %p76 = scmp.eq.s32.totalorder %s17, 1
      %p77 = scmp.ne.s32.totalorder %s72, %s74
      %p78 = scmp.eq.s32.totalorder %s17, 0
      %p79 = por %p77, %p78
      %p80 = scmp.ne.s32.totalorder %s72, %s74
      %p81 = scmp.eq.s32.totalorder %s22, 1
      %p82 = por %p80, %p81
      %p83 = scmp.ne.s32.totalorder %s74, %s75
      %p84 = scmp.eq.s32.totalorder %s22, 0
      %p85 = por %p83, %p84
      %p86 = scmp.ne.s32.totalorder %s74, %s75
      %p87 = scmp.eq.s32.totalorder %s23, 1
      %p88 = por %p86, %p87
      %p90 = scmp.ne.s32.totalorder %s75, %s89
      %p91 = scmp.eq.s32.totalorder %s23, 0
      %p92 = por %p90, %p91
      %s94 = sadd.s32 %s93, 1
      %p97 = scmp.eq.s32.totalorder %s17, 1
      %p98 = scmp.ne.s32.totalorder %s93, %s95
      %p99 = scmp.eq.s32.totalorder %s17, 0
      %p100 = por %p98, %p99
      %p101 = scmp.ne.s32.totalorder %s93, %s95
      %p102 = scmp.eq.s32.totalorder %s22, 1
      %p103 = por %p101, %p102
      %p104 = scmp.ne.s32.totalorder %s95, %s96
      %p105 = scmp.eq.s32.totalorder %s22, 0
      %p106 = por %p104, %p105
      %p107 = scmp.ne.s32.totalorder %s95, %s96
      %p108 = scmp.eq.s32.totalorder %s23, 1
      %p109 = por %p107, %p108
      %p111 = scmp.ne.s32.totalorder %s96, %s110
      %p112 = scmp.eq.s32.totalorder %s23, 0
      %p113 = por %p111, %p112
      %s115 = sadd.s32 %s114, 1
      %p118 = scmp.eq.s32.totalorder %s17, 1
      %p119 = scmp.ne.s32.totalorder %s114, %s116
      %p120 = scmp.eq.s32.totalorder %s17, 0
      %p121 = por %p119, %p120
      %p122 = scmp.ne.s32.totalorder %s114, %s116
      %p123 = scmp.eq.s32.totalorder %s22, 1
      %p124 = por %p122, %p123
      %p125 = scmp.ne.s32.totalorder %s116, %s117
      %p126 = scmp.eq.s32.totalorder %s22, 0
      %p127 = por %p125, %p126
      %p128 = scmp.ne.s32.totalorder %s116, %s117
      %p129 = scmp.eq.s32.totalorder %s23, 1
      %p130 = por %p128, %p129
      %p132 = scmp.ne.s32.totalorder %s117, %s131
      %p133 = scmp.eq.s32.totalorder %s23, 0
      %p134 = por %p132, %p133
      %s136 = sadd.s32 %s135, 1
      %p139 = scmp.eq.s32.totalorder %s17, 1
      %p140 = scmp.ne.s32.totalorder %s135, %s137
      %p141 = scmp.eq.s32.totalorder %s17, 0
      %p142 = por %p140, %p141
      %p143 = scmp.ne.s32.totalorder %s135, %s137
      %p144 = scmp.eq.s32.totalorder %s22, 1
      %p145 = por %p143, %p144
      %p146 = scmp.ne.s32.totalorder %s137, %s138
      %p147 = scmp.eq.s32.totalorder %s22, 0
      %p148 = por %p146, %p147
      %p149 = scmp.ne.s32.totalorder %s137, %s138
      %p150 = scmp.eq.s32.totalorder %s23, 1
      %p151 = por %p149, %p150
      %p153 = scmp.ne.s32.totalorder %s138, %s152
      %p154 = scmp.eq.s32.totalorder %s23, 0
      %p155 = por %p153, %p154
      %s157 = sadd.s32 %s156, 1
      %p160 = scmp.eq.s32.totalorder %s17, 1
      %p161 = scmp.ne.s32.totalorder %s156, %s158
      %p162 = scmp.eq.s32.totalorder %s17, 0
      %p163 = por %p161, %p162
      %p164 = scmp.ne.s32.totalorder %s156, %s158
      %p165 = scmp.eq.s32.totalorder %s22, 1
      %p166 = por %p164, %p165
      %p167 = scmp.ne.s32.totalorder %s158, %s159
      %p168 = scmp.eq.s32.totalorder %s22, 0
      %p169 = por %p167, %p168
      %p170 = scmp.ne.s32.totalorder %s158, %s159
      %p171 = scmp.eq.s32.totalorder %s23, 1
      %p172 = por %p170, %p171
      %p174 = scmp.ne.s32.totalorder %s159, %s173
      %p175 = scmp.eq.s32.totalorder %s23, 0
      %p176 = por %p174, %p175
      %s177 = ssub.s32 %s17, %s24
      %p178 = scmp.eq.s32.totalorder %s177, 0
      %s180 = sadd.s32 %s179, 1
      %s181 = scalar_select %p178, %s179, %s180
      %p184 = pneg %p178
      %p185 = scmp.eq.s32.totalorder %s17, 1
      %p186 = por %p184, %p185
      %p187 = scmp.ne.s32.totalorder %s179, %s182
      %p188 = scmp.eq.s32.totalorder %s17, 0
      %p189 = por %p187, %p188
      %p190 = scmp.ne.s32.totalorder %s179, %s182
      %p191 = scmp.eq.s32.totalorder %s22, 1
      %p192 = por %p190, %p191
      %p193 = scmp.ne.s32.totalorder %s182, %s183
      %p194 = scmp.eq.s32.totalorder %s22, 0
      %p195 = por %p193, %p194
      %p196 = scmp.ne.s32.totalorder %s182, %s183
      %p197 = scmp.eq.s32.totalorder %s23, 1
      %p198 = por %p196, %p197
      %p200 = scmp.ne.s32.totalorder %s183, %s199
      %p201 = scmp.eq.s32.totalorder %s23, 0
      %p202 = por %p200, %p201
      %p203 = scmp.le.s32.totalorder 1, %s17
      %p204 = scmp.lt.s32.totalorder %s17, 3
      %p205 = pnand %p203, %p204
      %p206 = pneg %p205
      // Predicated region
      $region9: #{tpu_custom_call.1} parent=5 // pred_check
        _
      $region10: #{tpu_custom_call.1} parent=5 // pred_check_branch
        %208 = sbr.rel (%p205) target = $region12
      $region11: #{tpu_custom_call.1} parent=5 // pred_region
        %s209 = ssub.s32 %s17, 1
        // Predicated region
        $region13: #{tpu_custom_call.1} parent=11 // pred_check
          %p210 = pneg %p38
        $region14: #{tpu_custom_call.1} parent=11 // pred_check_branch
          %212 = sbr.rel (%p210) target = $region16
        $region15: #{tpu_custom_call.1} parent=11 // pred_region
          _
        $region16: #{tpu_custom_call.1} parent=11 // pred_fallthru
          _
        // Predicated region
        $region17: #{tpu_custom_call.1} parent=11 // pred_check
          %p213 = pneg %p85
        $region18: #{tpu_custom_call.1} parent=11 // pred_check_branch
          %215 = sbr.rel (%p213) target = $region20
        $region19: #{tpu_custom_call.1} parent=11 // pred_region
          _
        $region20: #{tpu_custom_call.1} parent=11 // pred_fallthru
          _
        // Predicated region
        $region21: #{tpu_custom_call.1} parent=11 // pred_check
          %p216 = pneg %p106
        $region22: #{tpu_custom_call.1} parent=11 // pred_check_branch
          %218 = sbr.rel (%p216) target = $region24
        $region23: #{tpu_custom_call.1} parent=11 // pred_region
          _
        $region24: #{tpu_custom_call.1} parent=11 // pred_fallthru
          _
        // Predicated region
        $region25: #{tpu_custom_call.1} parent=11 // pred_check
          %p219 = pneg %p127
        $region26: #{tpu_custom_call.1} parent=11 // pred_check_branch
          %221 = sbr.rel (%p219) target = $region28
        $region27: #{tpu_custom_call.1} parent=11 // pred_region
          _
        $region28: #{tpu_custom_call.1} parent=11 // pred_fallthru
          _
        // Predicated region
        $region29: #{tpu_custom_call.1} parent=11 // pred_check
          %p222 = pneg %p148
        $region30: #{tpu_custom_call.1} parent=11 // pred_check_branch
          %224 = sbr.rel (%p222) target = $region32
        $region31: #{tpu_custom_call.1} parent=11 // pred_region
          _
        $region32: #{tpu_custom_call.1} parent=11 // pred_fallthru
          _
        // Predicated region
        $region33: #{tpu_custom_call.1} parent=11 // pred_check
          %p225 = pneg %p169
        $region34: #{tpu_custom_call.1} parent=11 // pred_check_branch
          %227 = sbr.rel (%p225) target = $region36
        $region35: #{tpu_custom_call.1} parent=11 // pred_region
          _
        $region36: #{tpu_custom_call.1} parent=11 // pred_fallthru
          _
      $region12: #{tpu_custom_call.1} parent=5 // pred_fallthru
        _
      %p228 = scmp.lt.s32.totalorder %s17, 2
      // Predicated region
      $region37: #{tpu_custom_call.1} parent=5 // pred_check
        %p229 = pneg %p228
      $region38: #{tpu_custom_call.1} parent=5 // pred_check_branch
        %231 = sbr.rel (%p229) target = $region40
      $region39: #{tpu_custom_call.1} parent=5 // pred_region
        // Predicated region
        $region41: #{tpu_custom_call.1} parent=39 // pred_check
          %p232 = pneg %p58
        $region42: #{tpu_custom_call.1} parent=39 // pred_check_branch
          %234 = sbr.rel (%p232) target = $region44
        $region43: #{tpu_custom_call.1} parent=39 // pred_region
          %s235 = sand.u32 %s48, 1
          %s236 = scalar_lea.sflag [#allocation4], %s235
          %s237 = sand.u32 %s48, 1
          %s238 = smul.addr %s237, 128
          %s239 = scalar_lea.vmem [#allocation3], %s238
          %241 = vsyncadd %s236, 0
          %s242 = smul.addr %s17, 16
          %s243 = smul.addr %s242, 8
          %s244 = scalar_lea.hbm %s1, %s243
          %s245 = sshll.u32 %s244, 4
          %s246 = int_to_ptr.hbm [resolvable:$true] %s245
          %s247 = sshll.u32 %s239, 4
          %s248 = int_to_ptr.vmem [resolvable:$true] %s247
          %253 = dma.hbm_to_vmem [thread:$0]  %s246, 2048, %s248, %s236, 512, 512, 32
        $region44: #{tpu_custom_call.1} parent=39 // pred_fallthru
          _
      $region40: #{tpu_custom_call.1} parent=5 // pred_fallthru
        _
      %p254 = scmp.le.s32.totalorder 1, %s17
      %p255 = scmp.lt.s32.totalorder %s17, 3
      %p256 = pnand %p254, %p255
      %p257 = pneg %p256
      // Predicated region
      $region45: #{tpu_custom_call.1} parent=5 // pred_check
        _
      $region46: #{tpu_custom_call.1} parent=5 // pred_check_branch
        %259 = sbr.rel (%p256) target = $region48
      $region47: #{tpu_custom_call.1} parent=5 // pred_region
        %s260 = ssub.s32 %s17, 1
        %s261 = sand.u32 %s51, 1
        %s262 = scalar_lea.sflag [#allocation4], %s261
        %s263 = sand.u32 %s51, 1
        %s264 = smul.addr %s263, 128
        %s265 = scalar_lea.vmem [#allocation3], %s264
        // Predicated region
        $region49: #{tpu_custom_call.1} parent=47 // pred_check
          %p266 = pneg %p64
        $region50: #{tpu_custom_call.1} parent=47 // pred_check_branch
          %268 = sbr.rel (%p266) target = $region52
        $region51: #{tpu_custom_call.1} parent=47 // pred_region
          %270 = dma.done %s262, 2048
        $region52: #{tpu_custom_call.1} parent=47 // pred_fallthru
          _
        %p271 = pneg %p38
        %p272 = pneg %p35
        %s273 = sand.u32 %s51, 1
        %s274 = scalar_lea.sflag [#allocation4], %s273
        %s275 = sand.u32 %s51, 1
        %s276 = smul.addr %s275, 128
        %s277 = scalar_lea.vmem [#allocation3], %s276
        %p278 = pneg %p64
        %p279 = pneg %p61
        %p280 = pneg %p85
        %p281 = pneg %p82
        %p282 = pneg %p106
        %p283 = pneg %p103
        %p284 = pneg %p127
        %p285 = pneg %p124
        %p286 = pneg %p148
        %p287 = pneg %p145
        %p288 = pneg %p169
        %p289 = pneg %p166
        %p290 = pneg %p195
        %p291 = pneg %p192
        %p292 = scmp.lt.s32.totalorder %s22, 1
        %s293 = scalar_select %p292, %s22, 1
        %s294 = smul.addr %s293, 20
        %s295 = smul.addr %s294, 8
        %s296 = scalar_lea.vmem %s7, %s295
        %p297 = scmp.lt.s32.totalorder %s22, 1
        %s298 = scalar_select %p297, %s22, 1
        %s299 = smul.addr %s298, 20
        %s300 = smul.addr %s299, 8
        %s301 = scalar_lea.vmem %s7, %s300
        %v302 = vld [vmem:[%s265] sm:$0xff]
        %v303 = vld [vmem:[%s265 + $0x8] sm:$0xff]
        %v304 = vld [vmem:[%s265 + $0x10] sm:$0xff]
        %v305 = vld [vmem:[%s265 + $0x18] sm:$0xff]
        %v306 = vld [vmem:[%s265 + $0x20] sm:$0xff]
        %v307 = vld [vmem:[%s265 + $0x28] sm:$0xff]
        %v308 = vld [vmem:[%s265 + $0x30] sm:$0xff]
        %v309 = vld [vmem:[%s265 + $0x38] sm:$0xff]
        %v310 = vld [vmem:[%s265 + $0x40] sm:$0xff]
        %v311 = vld [vmem:[%s265 + $0x48] sm:$0xff]
        %v312 = vld [vmem:[%s265 + $0x50] sm:$0xff]
        %v313 = vld [vmem:[%s265 + $0x58] sm:$0xff]
        %v314 = vld [vmem:[%s265 + $0x60] sm:$0xff]
        %v315 = vld [vmem:[%s265 + $0x68] sm:$0xff]
        %v316 = vld [vmem:[%s265 + $0x70] sm:$0xff]
        %v317 = vld [vmem:[%s265 + $0x78] sm:$0xff]
        %v318 = vld [vmem:[%s0] sm:$0xff]
        %335 = vrot.lane.b32.xlu0 %v302, 33
        %v336 = vpop.permute.xlu0 %335
        %337 = vrot.lane.b32.xlu0 %v303, 33
        %v338 = vpop.permute.xlu0 %337
        %339 = vrot.lane.b32.xlu0 %v304, 33
        %v340 = vpop.permute.xlu0 %339
        %341 = vrot.lane.b32.xlu0 %v305, 33
        %v342 = vpop.permute.xlu0 %341
        %343 = vrot.lane.b32.xlu0 %v306, 33
        %v344 = vpop.permute.xlu0 %343
        %345 = vrot.lane.b32.xlu0 %v307, 33
        %v346 = vpop.permute.xlu0 %345
        %347 = vrot.lane.b32.xlu0 %v308, 33
        %v348 = vpop.permute.xlu0 %347
        %349 = vrot.lane.b32.xlu0 %v309, 33
        %v350 = vpop.permute.xlu0 %349
        %351 = vrot.lane.b32.xlu0 %v310, 33
        %v352 = vpop.permute.xlu0 %351
        %353 = vrot.lane.b32.xlu0 %v311, 33
        %v354 = vpop.permute.xlu0 %353
        %355 = vrot.lane.b32.xlu0 %v312, 33
        %v356 = vpop.permute.xlu0 %355
        %357 = vrot.lane.b32.xlu0 %v313, 33
        %v358 = vpop.permute.xlu0 %357
        %359 = vrot.lane.b32.xlu0 %v314, 33
        %v360 = vpop.permute.xlu0 %359
        %361 = vrot.lane.b32.xlu0 %v315, 33
        %v362 = vpop.permute.xlu0 %361
        %363 = vrot.lane.b32.xlu0 %v316, 33
        %v364 = vpop.permute.xlu0 %363
        %365 = vrot.lane.b32.xlu0 %v317, 33
        %v366 = vpop.permute.xlu0 %365
        %vm367 = vcmask 269312
        %v368 = vsel %vm367, %v336, %v338
        %v369 = vsel %vm367, %v338, %v340
        %v370 = vsel %vm367, %v340, %v342
        %v371 = vsel %vm367, %v344, %v346
        %v372 = vsel %vm367, %v346, %v348
        %v373 = vsel %vm367, %v348, %v350
        %v374 = vsel %vm367, %v352, %v354
        %v375 = vsel %vm367, %v354, %v356
        %v376 = vsel %vm367, %v356, %v358
        %v377 = vsel %vm367, %v360, %v362
        %v378 = vsel %vm367, %v362, %v364
        %v379 = vsel %vm367, %v364, %v366
        %v400 = vsel %vm367, 0.0, %v336
        %v401 = vsel %vm367, 0.0, %v344
        %v402 = vsel %vm367, 0.0, %v352
        %v403 = vsel %vm367, 0.0, %v360
        %v404 = vsel %vm367, %v342, 0.0
        %v405 = vsel %vm367, %v350, 0.0
        %v406 = vsel %vm367, %v358, 0.0
        %v407 = vsel %vm367, %v366, 0.0
        %v409 = vperm.slane %v318, 0
        %v410 = vperm.slane %v318, 2
        %v411 = vperm.slane %v318, 4
        %v412 = vperm.slane %v318, 6
        %v417 = vperm.slane %v409, 0
        %v418 = vperm.slane %v410, 0
        %v419 = vperm.slane %v411, 0
        %v420 = vperm.slane %v412, 0
        %v421 = vmul.f32 %v400, %v417
        %v422 = vmul.f32 %v368, %v418
        %v423 = vmul.f32 %v369, %v419
        %v424 = vmul.f32 %v370, %v420
        %v425 = vmul.f32 %v401, %v417
        %v426 = vmul.f32 %v371, %v418
        %v427 = vmul.f32 %v372, %v419
        %v428 = vmul.f32 %v373, %v420
        %v429 = vmul.f32 %v402, %v417
        %v430 = vmul.f32 %v374, %v418
        %v431 = vmul.f32 %v375, %v419
        %v432 = vmul.f32 %v376, %v420
        %v433 = vmul.f32 %v403, %v417
        %v434 = vmul.f32 %v377, %v418
        %v435 = vmul.f32 %v378, %v419
        %v436 = vmul.f32 %v379, %v420
        %v437 = vperm.slane %v318, 1
        %v438 = vperm.slane %v318, 3
        %v439 = vperm.slane %v318, 5
        %v440 = vperm.slane %v318, 7
        %v445 = vperm.slane %v437, 1
        %v446 = vperm.slane %v438, 1
        %v447 = vperm.slane %v439, 1
        %v448 = vperm.slane %v440, 1
        %453 = vrot.lane.b32.xlu0 %v445, 2
        %v454 = vpop.permute.xlu0 %453
        %455 = vrot.lane.b32.xlu0 %v446, 2
        %v456 = vpop.permute.xlu0 %455
        %457 = vrot.lane.b32.xlu0 %v447, 2
        %v458 = vpop.permute.xlu0 %457
        %459 = vrot.lane.b32.xlu0 %v448, 2
        %v460 = vpop.permute.xlu0 %459
        %vm461 = vcmask 15360
        %v462 = vsel %vm461, %v454, %v456
        %v463 = vsel %vm461, %v456, %v458
        %v464 = vsel %vm461, %v458, %v460
        %v470 = vmul.f32 %v400, %v454
        %v471 = vmul.f32 %v368, %v462
        %v472 = vmul.f32 %v369, %v463
        %v473 = vmul.f32 %v370, %v464
        %v474 = vmul.f32 %v404, %v460
        %v475 = vmul.f32 %v401, %v454
        %v476 = vmul.f32 %v371, %v462
        %v477 = vmul.f32 %v372, %v463
        %v478 = vmul.f32 %v373, %v464
        %v479 = vmul.f32 %v405, %v460
        %v480 = vmul.f32 %v402, %v454
        %v481 = vmul.f32 %v374, %v462
        %v482 = vmul.f32 %v375, %v463
        %v483 = vmul.f32 %v376, %v464
        %v484 = vmul.f32 %v406, %v460
        %v485 = vmul.f32 %v403, %v454
        %v486 = vmul.f32 %v377, %v462
        %v487 = vmul.f32 %v378, %v463
        %v488 = vmul.f32 %v379, %v464
        %v489 = vmul.f32 %v407, %v460
        %494 = vrot.lane.b32.xlu0 %v417, 32
        %v495 = vpop.permute.xlu0 %494
        %496 = vrot.lane.b32.xlu0 %v418, 32
        %v497 = vpop.permute.xlu0 %496
        %498 = vrot.lane.b32.xlu0 %v419, 32
        %v499 = vpop.permute.xlu0 %498
        %500 = vrot.lane.b32.xlu0 %v420, 32
        %v501 = vpop.permute.xlu0 %500
        %vm502 = vcmask 261120
        %v503 = vsel %vm502, %v495, %v497
        %v504 = vsel %vm502, %v497, %v499
        %v505 = vsel %vm502, %v499, %v501
        %v511 = vmul.f32 %v400, %v495
        %v512 = vmul.f32 %v368, %v503
        %v513 = vmul.f32 %v369, %v504
        %v514 = vmul.f32 %v370, %v505
        %v515 = vmul.f32 %v404, %v501
        %v516 = vmul.f32 %v401, %v495
        %v517 = vmul.f32 %v371, %v503
        %v518 = vmul.f32 %v372, %v504
        %v519 = vmul.f32 %v373, %v505
        %v520 = vmul.f32 %v405, %v501
        %v521 = vmul.f32 %v402, %v495
        %v522 = vmul.f32 %v374, %v503
        %v523 = vmul.f32 %v375, %v504
        %v524 = vmul.f32 %v376, %v505
        %v525 = vmul.f32 %v406, %v501
        %v526 = vmul.f32 %v403, %v495
        %v527 = vmul.f32 %v377, %v503
        %v528 = vmul.f32 %v378, %v504
        %v529 = vmul.f32 %v379, %v505
        %v530 = vmul.f32 %v407, %v501
        %531 = vrot.lane.b32.xlu0 %v445, 34
        %v532 = vpop.permute.xlu0 %531
        %533 = vrot.lane.b32.xlu0 %v446, 34
        %v534 = vpop.permute.xlu0 %533
        %535 = vrot.lane.b32.xlu0 %v447, 34
        %v536 = vpop.permute.xlu0 %535
        %537 = vrot.lane.b32.xlu0 %v448, 34
        %v538 = vpop.permute.xlu0 %537
        %vm539 = vcmask 277504
        %v540 = vsel %vm539, %v532, %v534
        %v541 = vsel %vm539, %v534, %v536
        %v542 = vsel %vm539, %v536, %v538
        %v548 = vmul.f32 %v400, %v532
        %v549 = vmul.f32 %v368, %v540
        %v550 = vmul.f32 %v369, %v541
        %v551 = vmul.f32 %v370, %v542
        %v552 = vmul.f32 %v404, %v538
        %v553 = vmul.f32 %v401, %v532
        %v554 = vmul.f32 %v371, %v540
        %v555 = vmul.f32 %v372, %v541
        %v556 = vmul.f32 %v373, %v542
        %v557 = vmul.f32 %v405, %v538
        %v558 = vmul.f32 %v402, %v532
        %v559 = vmul.f32 %v374, %v540
        %v560 = vmul.f32 %v375, %v541
        %v561 = vmul.f32 %v376, %v542
        %v562 = vmul.f32 %v406, %v538
        %v563 = vmul.f32 %v403, %v532
        %v564 = vmul.f32 %v377, %v540
        %v565 = vmul.f32 %v378, %v541
        %v566 = vmul.f32 %v379, %v542
        %v567 = vmul.f32 %v407, %v538
        %568 = vrot.lane.b32.xlu0 %v417, 64
        %v569 = vpop.permute.xlu0 %568
        %570 = vrot.lane.b32.xlu0 %v418, 64
        %v571 = vpop.permute.xlu0 %570
        %572 = vrot.lane.b32.xlu0 %v419, 64
        %v573 = vpop.permute.xlu0 %572
        %574 = vrot.lane.b32.xlu0 %v420, 64
        %v575 = vpop.permute.xlu0 %574
        %vm576 = vcmask 523264
        %v577 = vsel %vm576, %v569, %v571
        %v578 = vsel %vm576, %v571, %v573
        %v579 = vsel %vm576, %v573, %v575
        %v585 = vmul.f32 %v400, %v569
        %v586 = vmul.f32 %v368, %v577
        %v587 = vmul.f32 %v369, %v578
        %v588 = vmul.f32 %v370, %v579
        %v589 = vmul.f32 %v404, %v575
        %v590 = vmul.f32 %v401, %v569
        %v591 = vmul.f32 %v371, %v577
        %v592 = vmul.f32 %v372, %v578
        %v593 = vmul.f32 %v373, %v579
        %v594 = vmul.f32 %v405, %v575
        %v595 = vmul.f32 %v402, %v569
        %v596 = vmul.f32 %v374, %v577
        %v597 = vmul.f32 %v375, %v578
        %v598 = vmul.f32 %v376, %v579
        %v599 = vmul.f32 %v406, %v575
        %v600 = vmul.f32 %v403, %v569
        %v601 = vmul.f32 %v377, %v577
        %v602 = vmul.f32 %v378, %v578
        %v603 = vmul.f32 %v379, %v579
        %v604 = vmul.f32 %v407, %v575
        %605 = vrot.lane.b32.xlu0 %v445, 66
        %v606 = vpop.permute.xlu0 %605
        %607 = vrot.lane.b32.xlu0 %v446, 66
        %v608 = vpop.permute.xlu0 %607
        %609 = vrot.lane.b32.xlu0 %v447, 66
        %v610 = vpop.permute.xlu0 %609
        %611 = vrot.lane.b32.xlu0 %v448, 66
        %v612 = vpop.permute.xlu0 %611
        %vm613 = vcmask 539648
        %v614 = vsel %vm613, %v606, %v608
        %v615 = vsel %vm613, %v608, %v610
        %v616 = vsel %vm613, %v610, %v612
        %v622 = vmul.f32 %v400, %v606
        %v623 = vmul.f32 %v368, %v614
        %v624 = vmul.f32 %v369, %v615
        %v625 = vmul.f32 %v370, %v616
        %v626 = vmul.f32 %v404, %v612
        %v627 = vmul.f32 %v401, %v606
        %v628 = vmul.f32 %v371, %v614
        %v629 = vmul.f32 %v372, %v615
        %v630 = vmul.f32 %v373, %v616
        %v631 = vmul.f32 %v405, %v612
        %v632 = vmul.f32 %v402, %v606
        %v633 = vmul.f32 %v374, %v614
        %v634 = vmul.f32 %v375, %v615
        %v635 = vmul.f32 %v376, %v616
        %v636 = vmul.f32 %v406, %v612
        %v637 = vmul.f32 %v403, %v606
        %v638 = vmul.f32 %v377, %v614
        %v639 = vmul.f32 %v378, %v615
        %v640 = vmul.f32 %v379, %v616
        %v641 = vmul.f32 %v407, %v612
        %650 = vrot.lane.b32.xlu0 %v400, 127
        %v651 = vpop.permute.xlu0 %650
        %652 = vrot.lane.b32.xlu0 %v368, 127
        %v653 = vpop.permute.xlu0 %652
        %654 = vrot.lane.b32.xlu0 %v369, 127
        %v655 = vpop.permute.xlu0 %654
        %656 = vrot.lane.b32.xlu0 %v370, 127
        %v657 = vpop.permute.xlu0 %656
        %658 = vrot.lane.b32.xlu0 %v404, 127
        %v659 = vpop.permute.xlu0 %658
        %660 = vrot.lane.b32.xlu0 %v401, 127
        %v661 = vpop.permute.xlu0 %660
        %662 = vrot.lane.b32.xlu0 %v371, 127
        %v663 = vpop.permute.xlu0 %662
        %664 = vrot.lane.b32.xlu0 %v372, 127
        %v665 = vpop.permute.xlu0 %664
        %666 = vrot.lane.b32.xlu0 %v373, 127
        %v667 = vpop.permute.xlu0 %666
        %668 = vrot.lane.b32.xlu0 %v405, 127
        %v669 = vpop.permute.xlu0 %668
        %670 = vrot.lane.b32.xlu0 %v402, 127
        %v671 = vpop.permute.xlu0 %670
        %672 = vrot.lane.b32.xlu0 %v374, 127
        %v673 = vpop.permute.xlu0 %672
        %674 = vrot.lane.b32.xlu0 %v375, 127
        %v675 = vpop.permute.xlu0 %674
        %676 = vrot.lane.b32.xlu0 %v376, 127
        %v677 = vpop.permute.xlu0 %676
        %678 = vrot.lane.b32.xlu0 %v406, 127
        %v679 = vpop.permute.xlu0 %678
        %680 = vrot.lane.b32.xlu0 %v403, 127
        %v681 = vpop.permute.xlu0 %680
        %682 = vrot.lane.b32.xlu0 %v377, 127
        %v683 = vpop.permute.xlu0 %682
        %684 = vrot.lane.b32.xlu0 %v378, 127
        %v685 = vpop.permute.xlu0 %684
        %686 = vrot.lane.b32.xlu0 %v379, 127
        %v687 = vpop.permute.xlu0 %686
        %688 = vrot.lane.b32.xlu0 %v407, 127
        %v689 = vpop.permute.xlu0 %688
        %vm690 = vcmask 1039360
        %v691 = vsel %vm690, %v651, %v653
        %v692 = vsel %vm690, %v653, %v655
        %v693 = vsel %vm690, %v655, %v657
        %v694 = vsel %vm690, %v657, %v659
        %v695 = vsel %vm690, %v661, %v663
        %v696 = vsel %vm690, %v663, %v665
        %v697 = vsel %vm690, %v665, %v667
        %v698 = vsel %vm690, %v667, %v669
        %v699 = vsel %vm690, %v671, %v673
        %v700 = vsel %vm690, %v673, %v675
        %v701 = vsel %vm690, %v675, %v677
        %v702 = vsel %vm690, %v677, %v679
        %v703 = vsel %vm690, %v681, %v683
        %v704 = vsel %vm690, %v683, %v685
        %v705 = vsel %vm690, %v685, %v687
        %v706 = vsel %vm690, %v687, %v689
        %743 = vrot.lane.b32.xlu0 %v470, 126
        %v744 = vpop.permute.xlu0 %743
        %745 = vrot.lane.b32.xlu0 %v471, 126
        %v746 = vpop.permute.xlu0 %745
        %747 = vrot.lane.b32.xlu0 %v472, 126
        %v748 = vpop.permute.xlu0 %747
        %749 = vrot.lane.b32.xlu0 %v473, 126
        %v750 = vpop.permute.xlu0 %749
        %751 = vrot.lane.b32.xlu0 %v474, 126
        %v752 = vpop.permute.xlu0 %751
        %753 = vrot.lane.b32.xlu0 %v475, 126
        %v754 = vpop.permute.xlu0 %753
        %755 = vrot.lane.b32.xlu0 %v476, 126
        %v756 = vpop.permute.xlu0 %755
        %757 = vrot.lane.b32.xlu0 %v477, 126
        %v758 = vpop.permute.xlu0 %757
        %759 = vrot.lane.b32.xlu0 %v478, 126
        %v760 = vpop.permute.xlu0 %759
        %761 = vrot.lane.b32.xlu0 %v479, 126
        %v762 = vpop.permute.xlu0 %761
        %763 = vrot.lane.b32.xlu0 %v480, 126
        %v764 = vpop.permute.xlu0 %763
        %765 = vrot.lane.b32.xlu0 %v481, 126
        %v766 = vpop.permute.xlu0 %765
        %767 = vrot.lane.b32.xlu0 %v482, 126
        %v768 = vpop.permute.xlu0 %767
        %769 = vrot.lane.b32.xlu0 %v483, 126
        %v770 = vpop.permute.xlu0 %769
        %771 = vrot.lane.b32.xlu0 %v484, 126
        %v772 = vpop.permute.xlu0 %771
        %773 = vrot.lane.b32.xlu0 %v485, 126
        %v774 = vpop.permute.xlu0 %773
        %775 = vrot.lane.b32.xlu0 %v486, 126
        %v776 = vpop.permute.xlu0 %775
        %777 = vrot.lane.b32.xlu0 %v487, 126
        %v778 = vpop.permute.xlu0 %777
        %779 = vrot.lane.b32.xlu0 %v488, 126
        %v780 = vpop.permute.xlu0 %779
        %781 = vrot.lane.b32.xlu0 %v489, 126
        %v782 = vpop.permute.xlu0 %781
        %vm783 = vcmask 1031168
        %v784 = vsel %vm783, %v744, %v746
        %v785 = vsel %vm783, %v746, %v748
        %v786 = vsel %vm783, %v748, %v750
        %v787 = vsel %vm783, %v750, %v752
        %v788 = vsel %vm783, %v754, %v756
        %v789 = vsel %vm783, %v756, %v758
        %v790 = vsel %vm783, %v758, %v760
        %v791 = vsel %vm783, %v760, %v762
        %v792 = vsel %vm783, %v764, %v766
        %v793 = vsel %vm783, %v766, %v768
        %v794 = vsel %vm783, %v768, %v770
        %v795 = vsel %vm783, %v770, %v772
        %v796 = vsel %vm783, %v774, %v776
        %v797 = vsel %vm783, %v776, %v778
        %v798 = vsel %vm783, %v778, %v780
        %v799 = vsel %vm783, %v780, %v782
        %836 = vrot.lane.b32.xlu0 %v511, 96
        %v837 = vpop.permute.xlu0 %836
        %838 = vrot.lane.b32.xlu0 %v512, 96
        %v839 = vpop.permute.xlu0 %838
        %840 = vrot.lane.b32.xlu0 %v513, 96
        %v841 = vpop.permute.xlu0 %840
        %842 = vrot.lane.b32.xlu0 %v514, 96
        %v843 = vpop.permute.xlu0 %842
        %844 = vrot.lane.b32.xlu0 %v515, 96
        %v845 = vpop.permute.xlu0 %844
        %846 = vrot.lane.b32.xlu0 %v516, 96
        %v847 = vpop.permute.xlu0 %846
        %848 = vrot.lane.b32.xlu0 %v517, 96
        %v849 = vpop.permute.xlu0 %848
        %850 = vrot.lane.b32.xlu0 %v518, 96
        %v851 = vpop.permute.xlu0 %850
        %852 = vrot.lane.b32.xlu0 %v519, 96
        %v853 = vpop.permute.xlu0 %852
        %854 = vrot.lane.b32.xlu0 %v520, 96
        %v855 = vpop.permute.xlu0 %854
        %856 = vrot.lane.b32.xlu0 %v521, 96
        %v857 = vpop.permute.xlu0 %856
        %858 = vrot.lane.b32.xlu0 %v522, 96
        %v859 = vpop.permute.xlu0 %858
        %860 = vrot.lane.b32.xlu0 %v523, 96
        %v861 = vpop.permute.xlu0 %860
        %862 = vrot.lane.b32.xlu0 %v524, 96
        %v863 = vpop.permute.xlu0 %862
        %864 = vrot.lane.b32.xlu0 %v525, 96
        %v865 = vpop.permute.xlu0 %864
        %866 = vrot.lane.b32.xlu0 %v526, 96
        %v867 = vpop.permute.xlu0 %866
        %868 = vrot.lane.b32.xlu0 %v527, 96
        %v869 = vpop.permute.xlu0 %868
        %870 = vrot.lane.b32.xlu0 %v528, 96
        %v871 = vpop.permute.xlu0 %870
        %872 = vrot.lane.b32.xlu0 %v529, 96
        %v873 = vpop.permute.xlu0 %872
        %874 = vrot.lane.b32.xlu0 %v530, 96
        %v875 = vpop.permute.xlu0 %874
        %vm876 = vcmask 785408
        %v877 = vsel %vm876, %v837, %v839
        %v878 = vsel %vm876, %v839, %v841
        %v879 = vsel %vm876, %v841, %v843
        %v880 = vsel %vm876, %v843, %v845
        %v881 = vsel %vm876, %v847, %v849
        %v882 = vsel %vm876, %v849, %v851
        %v883 = vsel %vm876, %v851, %v853
        %v884 = vsel %vm876, %v853, %v855
        %v885 = vsel %vm876, %v857, %v859
        %v886 = vsel %vm876, %v859, %v861
        %v887 = vsel %vm876, %v861, %v863
        %v888 = vsel %vm876, %v863, %v865
        %v889 = vsel %vm876, %v867, %v869
        %v890 = vsel %vm876, %v869, %v871
        %v891 = vsel %vm876, %v871, %v873
        %v892 = vsel %vm876, %v873, %v875
        %909 = vrot.lane.b32.xlu0 %v400, 95
        %v910 = vpop.permute.xlu0 %909
        %911 = vrot.lane.b32.xlu0 %v368, 95
        %v912 = vpop.permute.xlu0 %911
        %913 = vrot.lane.b32.xlu0 %v369, 95
        %v914 = vpop.permute.xlu0 %913
        %915 = vrot.lane.b32.xlu0 %v370, 95
        %v916 = vpop.permute.xlu0 %915
        %917 = vrot.lane.b32.xlu0 %v404, 95
        %v918 = vpop.permute.xlu0 %917
        %919 = vrot.lane.b32.xlu0 %v401, 95
        %v920 = vpop.permute.xlu0 %919
        %921 = vrot.lane.b32.xlu0 %v371, 95
        %v922 = vpop.permute.xlu0 %921
        %923 = vrot.lane.b32.xlu0 %v372, 95
        %v924 = vpop.permute.xlu0 %923
        %925 = vrot.lane.b32.xlu0 %v373, 95
        %v926 = vpop.permute.xlu0 %925
        %927 = vrot.lane.b32.xlu0 %v405, 95
        %v928 = vpop.permute.xlu0 %927
        %929 = vrot.lane.b32.xlu0 %v402, 95
        %v930 = vpop.permute.xlu0 %929
        %931 = vrot.lane.b32.xlu0 %v374, 95
        %v932 = vpop.permute.xlu0 %931
        %933 = vrot.lane.b32.xlu0 %v375, 95
        %v934 = vpop.permute.xlu0 %933
        %935 = vrot.lane.b32.xlu0 %v376, 95
        %v936 = vpop.permute.xlu0 %935
        %937 = vrot.lane.b32.xlu0 %v406, 95
        %v938 = vpop.permute.xlu0 %937
        %939 = vrot.lane.b32.xlu0 %v403, 95
        %v940 = vpop.permute.xlu0 %939
        %941 = vrot.lane.b32.xlu0 %v377, 95
        %v942 = vpop.permute.xlu0 %941
        %943 = vrot.lane.b32.xlu0 %v378, 95
        %v944 = vpop.permute.xlu0 %943
        %945 = vrot.lane.b32.xlu0 %v379, 95
        %v946 = vpop.permute.xlu0 %945
        %947 = vrot.lane.b32.xlu0 %v407, 95
        %v948 = vpop.permute.xlu0 %947
        %vm949 = vcmask 777216
        %v950 = vsel %vm949, %v910, %v912
        %v951 = vsel %vm949, %v912, %v914
        %v952 = vsel %vm949, %v914, %v916
        %v953 = vsel %vm949, %v916, %v918
        %v954 = vsel %vm949, %v920, %v922
        %v955 = vsel %vm949, %v922, %v924
        %v956 = vsel %vm949, %v924, %v926
        %v957 = vsel %vm949, %v926, %v928
        %v958 = vsel %vm949, %v930, %v932
        %v959 = vsel %vm949, %v932, %v934
        %v960 = vsel %vm949, %v934, %v936
        %v961 = vsel %vm949, %v936, %v938
        %v962 = vsel %vm949, %v940, %v942
        %v963 = vsel %vm949, %v942, %v944
        %v964 = vsel %vm949, %v944, %v946
        %v965 = vsel %vm949, %v946, %v948
        %1002 = vrot.lane.b32.xlu0 %v548, 94
        %v1003 = vpop.permute.xlu0 %1002
        %1004 = vrot.lane.b32.xlu0 %v549, 94
        %v1005 = vpop.permute.xlu0 %1004
        %1006 = vrot.lane.b32.xlu0 %v550, 94
        %v1007 = vpop.permute.xlu0 %1006
        %1008 = vrot.lane.b32.xlu0 %v551, 94
        %v1009 = vpop.permute.xlu0 %1008
        %1010 = vrot.lane.b32.xlu0 %v552, 94
        %v1011 = vpop.permute.xlu0 %1010
        %1012 = vrot.lane.b32.xlu0 %v553, 94
        %v1013 = vpop.permute.xlu0 %1012
        %1014 = vrot.lane.b32.xlu0 %v554, 94
        %v1015 = vpop.permute.xlu0 %1014
        %1016 = vrot.lane.b32.xlu0 %v555, 94
        %v1017 = vpop.permute.xlu0 %1016
        %1018 = vrot.lane.b32.xlu0 %v556, 94
        %v1019 = vpop.permute.xlu0 %1018
        %1020 = vrot.lane.b32.xlu0 %v557, 94
        %v1021 = vpop.permute.xlu0 %1020
        %1022 = vrot.lane.b32.xlu0 %v558, 94
        %v1023 = vpop.permute.xlu0 %1022
        %1024 = vrot.lane.b32.xlu0 %v559, 94
        %v1025 = vpop.permute.xlu0 %1024
        %1026 = vrot.lane.b32.xlu0 %v560, 94
        %v1027 = vpop.permute.xlu0 %1026
        %1028 = vrot.lane.b32.xlu0 %v561, 94
        %v1029 = vpop.permute.xlu0 %1028
        %1030 = vrot.lane.b32.xlu0 %v562, 94
        %v1031 = vpop.permute.xlu0 %1030
        %1032 = vrot.lane.b32.xlu0 %v563, 94
        %v1033 = vpop.permute.xlu0 %1032
        %1034 = vrot.lane.b32.xlu0 %v564, 94
        %v1035 = vpop.permute.xlu0 %1034
        %1036 = vrot.lane.b32.xlu0 %v565, 94
        %v1037 = vpop.permute.xlu0 %1036
        %1038 = vrot.lane.b32.xlu0 %v566, 94
        %v1039 = vpop.permute.xlu0 %1038
        %1040 = vrot.lane.b32.xlu0 %v567, 94
        %v1041 = vpop.permute.xlu0 %1040
        %vm1042 = vcmask 769024
        %v1043 = vsel %vm1042, %v1003, %v1005
        %v1044 = vsel %vm1042, %v1005, %v1007
        %v1045 = vsel %vm1042, %v1007, %v1009
        %v1046 = vsel %vm1042, %v1009, %v1011
        %v1047 = vsel %vm1042, %v1013, %v1015
        %v1048 = vsel %vm1042, %v1015, %v1017
        %v1049 = vsel %vm1042, %v1017, %v1019
        %v1050 = vsel %vm1042, %v1019, %v1021
        %v1051 = vsel %vm1042, %v1023, %v1025
        %v1052 = vsel %vm1042, %v1025, %v1027
        %v1053 = vsel %vm1042, %v1027, %v1029
        %v1054 = vsel %vm1042, %v1029, %v1031
        %v1055 = vsel %vm1042, %v1033, %v1035
        %v1056 = vsel %vm1042, %v1035, %v1037
        %v1057 = vsel %vm1042, %v1037, %v1039
        %v1058 = vsel %vm1042, %v1039, %v1041
        %1095 = vrot.lane.b32.xlu0 %v585, 64
        %v1096 = vpop.permute.xlu0 %1095
        %1097 = vrot.lane.b32.xlu0 %v586, 64
        %v1098 = vpop.permute.xlu0 %1097
        %1099 = vrot.lane.b32.xlu0 %v587, 64
        %v1100 = vpop.permute.xlu0 %1099
        %1101 = vrot.lane.b32.xlu0 %v588, 64
        %v1102 = vpop.permute.xlu0 %1101
        %1103 = vrot.lane.b32.xlu0 %v589, 64
        %v1104 = vpop.permute.xlu0 %1103
        %1105 = vrot.lane.b32.xlu0 %v590, 64
        %v1106 = vpop.permute.xlu0 %1105
        %1107 = vrot.lane.b32.xlu0 %v591, 64
        %v1108 = vpop.permute.xlu0 %1107
        %1109 = vrot.lane.b32.xlu0 %v592, 64
        %v1110 = vpop.permute.xlu0 %1109
        %1111 = vrot.lane.b32.xlu0 %v593, 64
        %v1112 = vpop.permute.xlu0 %1111
        %1113 = vrot.lane.b32.xlu0 %v594, 64
        %v1114 = vpop.permute.xlu0 %1113
        %1115 = vrot.lane.b32.xlu0 %v595, 64
        %v1116 = vpop.permute.xlu0 %1115
        %1117 = vrot.lane.b32.xlu0 %v596, 64
        %v1118 = vpop.permute.xlu0 %1117
        %1119 = vrot.lane.b32.xlu0 %v597, 64
        %v1120 = vpop.permute.xlu0 %1119
        %1121 = vrot.lane.b32.xlu0 %v598, 64
        %v1122 = vpop.permute.xlu0 %1121
        %1123 = vrot.lane.b32.xlu0 %v599, 64
        %v1124 = vpop.permute.xlu0 %1123
        %1125 = vrot.lane.b32.xlu0 %v600, 64
        %v1126 = vpop.permute.xlu0 %1125
        %1127 = vrot.lane.b32.xlu0 %v601, 64
        %v1128 = vpop.permute.xlu0 %1127
        %1129 = vrot.lane.b32.xlu0 %v602, 64
        %v1130 = vpop.permute.xlu0 %1129
        %1131 = vrot.lane.b32.xlu0 %v603, 64
        %v1132 = vpop.permute.xlu0 %1131
        %1133 = vrot.lane.b32.xlu0 %v604, 64
        %v1134 = vpop.permute.xlu0 %1133
        %v1135 = vsel %vm576, %v1096, %v1098
        %v1136 = vsel %vm576, %v1098, %v1100
        %v1137 = vsel %vm576, %v1100, %v1102
        %v1138 = vsel %vm576, %v1102, %v1104
        %v1139 = vsel %vm576, %v1106, %v1108
        %v1140 = vsel %vm576, %v1108, %v1110
        %v1141 = vsel %vm576, %v1110, %v1112
        %v1142 = vsel %vm576, %v1112, %v1114
        %v1143 = vsel %vm576, %v1116, %v1118
        %v1144 = vsel %vm576, %v1118, %v1120
        %v1145 = vsel %vm576, %v1120, %v1122
        %v1146 = vsel %vm576, %v1122, %v1124
        %v1147 = vsel %vm576, %v1126, %v1128
        %v1148 = vsel %vm576, %v1128, %v1130
        %v1149 = vsel %vm576, %v1130, %v1132
        %v1150 = vsel %vm576, %v1132, %v1134
        %1167 = vrot.lane.b32.xlu0 %v400, 63
        %v1168 = vpop.permute.xlu0 %1167
        %1169 = vrot.lane.b32.xlu0 %v368, 63
        %v1170 = vpop.permute.xlu0 %1169
        %1171 = vrot.lane.b32.xlu0 %v369, 63
        %v1172 = vpop.permute.xlu0 %1171
        %1173 = vrot.lane.b32.xlu0 %v370, 63
        %v1174 = vpop.permute.xlu0 %1173
        %1175 = vrot.lane.b32.xlu0 %v404, 63
        %v1176 = vpop.permute.xlu0 %1175
        %1177 = vrot.lane.b32.xlu0 %v401, 63
        %v1178 = vpop.permute.xlu0 %1177
        %1179 = vrot.lane.b32.xlu0 %v371, 63
        %v1180 = vpop.permute.xlu0 %1179
        %1181 = vrot.lane.b32.xlu0 %v372, 63
        %v1182 = vpop.permute.xlu0 %1181
        %1183 = vrot.lane.b32.xlu0 %v373, 63
        %v1184 = vpop.permute.xlu0 %1183
        %1185 = vrot.lane.b32.xlu0 %v405, 63
        %v1186 = vpop.permute.xlu0 %1185
        %1187 = vrot.lane.b32.xlu0 %v402, 63
        %v1188 = vpop.permute.xlu0 %1187
        %1189 = vrot.lane.b32.xlu0 %v374, 63
        %v1190 = vpop.permute.xlu0 %1189
        %1191 = vrot.lane.b32.xlu0 %v375, 63
        %v1192 = vpop.permute.xlu0 %1191
        %1193 = vrot.lane.b32.xlu0 %v376, 63
        %v1194 = vpop.permute.xlu0 %1193
        %1195 = vrot.lane.b32.xlu0 %v406, 63
        %v1196 = vpop.permute.xlu0 %1195
        %1197 = vrot.lane.b32.xlu0 %v403, 63
        %v1198 = vpop.permute.xlu0 %1197
        %1199 = vrot.lane.b32.xlu0 %v377, 63
        %v1200 = vpop.permute.xlu0 %1199
        %1201 = vrot.lane.b32.xlu0 %v378, 63
        %v1202 = vpop.permute.xlu0 %1201
        %1203 = vrot.lane.b32.xlu0 %v379, 63
        %v1204 = vpop.permute.xlu0 %1203
        %1205 = vrot.lane.b32.xlu0 %v407, 63
        %v1206 = vpop.permute.xlu0 %1205
        %vm1207 = vcmask 515072
        %v1208 = vsel %vm1207, %v1168, %v1170
        %v1209 = vsel %vm1207, %v1170, %v1172
        %v1210 = vsel %vm1207, %v1172, %v1174
        %v1211 = vsel %vm1207, %v1174, %v1176
        %v1212 = vsel %vm1207, %v1178, %v1180
        %v1213 = vsel %vm1207, %v1180, %v1182
        %v1214 = vsel %vm1207, %v1182, %v1184
        %v1215 = vsel %vm1207, %v1184, %v1186
        %v1216 = vsel %vm1207, %v1188, %v1190
        %v1217 = vsel %vm1207, %v1190, %v1192
        %v1218 = vsel %vm1207, %v1192, %v1194
        %v1219 = vsel %vm1207, %v1194, %v1196
        %v1220 = vsel %vm1207, %v1198, %v1200
        %v1221 = vsel %vm1207, %v1200, %v1202
        %v1222 = vsel %vm1207, %v1202, %v1204
        %v1223 = vsel %vm1207, %v1204, %v1206
        %1260 = vrot.lane.b32.xlu0 %v622, 62
        %v1261 = vpop.permute.xlu0 %1260
        %1262 = vrot.lane.b32.xlu0 %v623, 62
        %v1263 = vpop.permute.xlu0 %1262
        %1264 = vrot.lane.b32.xlu0 %v624, 62
        %v1265 = vpop.permute.xlu0 %1264
        %1266 = vrot.lane.b32.xlu0 %v625, 62
        %v1267 = vpop.permute.xlu0 %1266
        %1268 = vrot.lane.b32.xlu0 %v626, 62
        %v1269 = vpop.permute.xlu0 %1268
        %1270 = vrot.lane.b32.xlu0 %v627, 62
        %v1271 = vpop.permute.xlu0 %1270
        %1272 = vrot.lane.b32.xlu0 %v628, 62
        %v1273 = vpop.permute.xlu0 %1272
        %1274 = vrot.lane.b32.xlu0 %v629, 62
        %v1275 = vpop.permute.xlu0 %1274
        %1276 = vrot.lane.b32.xlu0 %v630, 62
        %v1277 = vpop.permute.xlu0 %1276
        %1278 = vrot.lane.b32.xlu0 %v631, 62
        %v1279 = vpop.permute.xlu0 %1278
        %1280 = vrot.lane.b32.xlu0 %v632, 62
        %v1281 = vpop.permute.xlu0 %1280
        %1282 = vrot.lane.b32.xlu0 %v633, 62
        %v1283 = vpop.permute.xlu0 %1282
        %1284 = vrot.lane.b32.xlu0 %v634, 62
        %v1285 = vpop.permute.xlu0 %1284
        %1286 = vrot.lane.b32.xlu0 %v635, 62
        %v1287 = vpop.permute.xlu0 %1286
        %1288 = vrot.lane.b32.xlu0 %v636, 62
        %v1289 = vpop.permute.xlu0 %1288
        %1290 = vrot.lane.b32.xlu0 %v637, 62
        %v1291 = vpop.permute.xlu0 %1290
        %1292 = vrot.lane.b32.xlu0 %v638, 62
        %v1293 = vpop.permute.xlu0 %1292
        %1294 = vrot.lane.b32.xlu0 %v639, 62
        %v1295 = vpop.permute.xlu0 %1294
        %1296 = vrot.lane.b32.xlu0 %v640, 62
        %v1297 = vpop.permute.xlu0 %1296
        %1298 = vrot.lane.b32.xlu0 %v641, 62
        %v1299 = vpop.permute.xlu0 %1298
        %vm1300 = vcmask 506880
        %v1301 = vsel %vm1300, %v1261, %v1263
        %v1302 = vsel %vm1300, %v1263, %v1265
        %v1303 = vsel %vm1300, %v1265, %v1267
        %v1304 = vsel %vm1300, %v1267, %v1269
        %v1305 = vsel %vm1300, %v1271, %v1273
        %v1306 = vsel %vm1300, %v1273, %v1275
        %v1307 = vsel %vm1300, %v1275, %v1277
        %v1308 = vsel %vm1300, %v1277, %v1279
        %v1309 = vsel %vm1300, %v1281, %v1283
        %v1310 = vsel %vm1300, %v1283, %v1285
        %v1311 = vsel %vm1300, %v1285, %v1287
        %v1312 = vsel %vm1300, %v1287, %v1289
        %v1313 = vsel %vm1300, %v1291, %v1293
        %v1314 = vsel %vm1300, %v1293, %v1295
        %v1315 = vsel %vm1300, %v1295, %v1297
        %v1316 = vsel %vm1300, %v1297, %v1299
        %v1333 = vld [vmem:[%s2] sm:$0xff]
        %v1334 = vld [vmem:[%s2 + $0x8] sm:$0xff]
        %v1335 = vld [vmem:[%s2 + $0x10] sm:$0xff]
        %v1336 = vld [vmem:[%s2 + $0x18] sm:$0xff]
        %v1337 = vld [vmem:[%s2 + $0x20] sm:$0xff]
        %v1338 = vld [vmem:[%s2 + $0x28] sm:$0xff]
        %v1339 = vld [vmem:[%s2 + $0x30] sm:$0xff]
        %v1340 = vld [vmem:[%s2 + $0x38] sm:$0xff]
        %v1341 = vld [vmem:[%s2 + $0x40] sm:$0xff]
        %v1342 = vld [vmem:[%s2 + $0x48] sm:$0xff]
        %v1343 = vld [vmem:[%s2 + $0x50] sm:$0xff]
        %v1344 = vld [vmem:[%s2 + $0x58] sm:$0xff]
        %v1345 = vld [vmem:[%s3] sm:$0xff]
        %v1346 = vld [vmem:[%s3 + $0x8] sm:$0xff]
        %v1347 = vld [vmem:[%s3 + $0x10] sm:$0xff]
        %v1348 = vld [vmem:[%s3 + $0x18] sm:$0xff]
        %1350 = vset.pattern.permute.xlu0 0
        %1351 = vperm.xlu0 %1350, %v1345
        %v1352 = vpop.permute.xlu0 %1351
        %1355 = vset.pattern.permute.xlu0 0
        %1356 = vperm.xlu0 %1355, %v1346
        %v1357 = vpop.permute.xlu0 %1356
        %1360 = vset.pattern.permute.xlu0 0
        %1361 = vperm.xlu0 %1360, %v1347
        %v1362 = vpop.permute.xlu0 %1361
        %1365 = vset.pattern.permute.xlu0 0
        %1366 = vperm.xlu0 %1365, %v1348
        %v1367 = vpop.permute.xlu0 %1366
        %v1370 = vsel %vm502, %v1335, 0
        %v1373 = vsel %vm502, %v1338, 0
        %v1376 = vsel %vm502, %v1341, 0
        %v1379 = vsel %vm502, %v1344, 0
        %1381 = vmatpush.msra.mxu0 %v889
        %1382 = vmatpush.msra.mxu0 %v885
        %1383 = vmatpush.msra.mxu0 %v881
        %1384 = vmatpush.msra.mxu0 %v877
        %1385 = vmatpush.msra.mxu0 %v796
        %1386 = vmatpush.msra.mxu0 %v792
        %1387 = vmatpush.msra.mxu0 %v788
        %1388 = vmatpush.msra.mxu0 %v784
        %1389 = vmatpush.msra.mxu0 %v703
        %1390 = vmatpush.msra.mxu0 %v699
        %1391 = vmatpush.msra.mxu0 %v695
        %1392 = vmatpush.msra.mxu0 %v691
        %1393 = vmatpush.msra.mxu0 %v433
        %1394 = vmatpush.msra.mxu0 %v429
        %1395 = vmatpush.msra.mxu0 %v425
        %1396 = vmatpush.msra.mxu0 %v421
        %1397 = vmatmul.f32.gmra.mxu0 %v1333
        %v1398 = vpop.f32.mrf.mxu0
        %v1399 = vadd.f32 %v1352, %v1398
        %1400 = vmatmul.f32.gmra.mxu0 %v1336
        %v1401 = vpop.f32.mrf.mxu0
        %v1402 = vadd.f32 %v1357, %v1401
        %1403 = vmatmul.f32.gmra.mxu0 %v1339
        %v1404 = vpop.f32.mrf.mxu0
        %v1405 = vadd.f32 %v1362, %v1404
        %1406 = vmatmul.f32.gmra.mxu0 %v1342
        %v1407 = vpop.f32.mrf.mxu0
        %v1408 = vadd.f32 %v1367, %v1407
        %1409 = vdwg.mxu0
        %1410 = vmatpush.msra.mxu0 %v1220
        %1411 = vmatpush.msra.mxu0 %v1216
        %1412 = vmatpush.msra.mxu0 %v1212
        %1413 = vmatpush.msra.mxu0 %v1208
        %1414 = vmatpush.msra.mxu0 %v1147
        %1415 = vmatpush.msra.mxu0 %v1143
        %1416 = vmatpush.msra.mxu0 %v1139
        %1417 = vmatpush.msra.mxu0 %v1135
        %1418 = vmatpush.msra.mxu0 %v1055
        %1419 = vmatpush.msra.mxu0 %v1051
        %1420 = vmatpush.msra.mxu0 %v1047
        %1421 = vmatpush.msra.mxu0 %v1043
        %1422 = vmatpush.msra.mxu0 %v962
        %1423 = vmatpush.msra.mxu0 %v958
        %1424 = vmatpush.msra.mxu0 %v954
        %1425 = vmatpush.msra.mxu0 %v950
        %1426 = vmatmul.f32.gmra.mxu0 %v1334
        %v1427 = vpop.f32.mrf.mxu0
        %v1428 = vadd.f32 %v1399, %v1427
        %1429 = vmatmul.f32.gmra.mxu0 %v1337
        %v1430 = vpop.f32.mrf.mxu0
        %v1431 = vadd.f32 %v1402, %v1430
        %1432 = vmatmul.f32.gmra.mxu0 %v1340
        %v1433 = vpop.f32.mrf.mxu0
        %v1434 = vadd.f32 %v1405, %v1433
        %1435 = vmatmul.f32.gmra.mxu0 %v1343
        %v1436 = vpop.f32.mrf.mxu0
        %v1437 = vadd.f32 %v1408, %v1436
        %1438 = vdwg.mxu0
        %1439 = vmatpush.msra.mxu0 0.0
        %1440 = vmatpush.msra.mxu0 0.0
        %1441 = vmatpush.msra.mxu0 0.0
        %1442 = vmatpush.msra.mxu0 0.0
        %1443 = vmatpush.msra.mxu0 0.0
        %1444 = vmatpush.msra.mxu0 0.0
        %1445 = vmatpush.msra.mxu0 0.0
        %1446 = vmatpush.msra.mxu0 0.0
        %1447 = vmatpush.msra.mxu0 0.0
        %1448 = vmatpush.msra.mxu0 0.0
        %1449 = vmatpush.msra.mxu0 0.0
        %1450 = vmatpush.msra.mxu0 0.0
        %1451 = vmatpush.msra.mxu0 %v1313
        %1452 = vmatpush.msra.mxu0 %v1309
        %1453 = vmatpush.msra.mxu0 %v1305
        %1454 = vmatpush.msra.mxu0 %v1301
        %1455 = vmatmul.f32.gmra.mxu0 %v1370
        %v1456 = vpop.f32.mrf.mxu0
        %v1457 = vadd.f32 %v1428, %v1456
        %1458 = vmatmul.f32.gmra.mxu0 %v1373
        %v1459 = vpop.f32.mrf.mxu0
        %v1460 = vadd.f32 %v1431, %v1459
        %1461 = vmatmul.f32.gmra.mxu0 %v1376
        %v1462 = vpop.f32.mrf.mxu0
        %v1463 = vadd.f32 %v1434, %v1462
        %1464 = vmatmul.f32.gmra.mxu0 %v1379
        %v1465 = vpop.f32.mrf.mxu0
        %v1466 = vadd.f32 %v1437, %v1465
        %1467 = vdwg.mxu0
        %1468 = vmatpush.msra.mxu0 %v890
        %1469 = vmatpush.msra.mxu0 %v886
        %1470 = vmatpush.msra.mxu0 %v882
        %1471 = vmatpush.msra.mxu0 %v878
        %1472 = vmatpush.msra.mxu0 %v797
        %1473 = vmatpush.msra.mxu0 %v793
        %1474 = vmatpush.msra.mxu0 %v789
        %1475 = vmatpush.msra.mxu0 %v785
        %1476 = vmatpush.msra.mxu0 %v704
        %1477 = vmatpush.msra.mxu0 %v700
        %1478 = vmatpush.msra.mxu0 %v696
        %1479 = vmatpush.msra.mxu0 %v692
        %1480 = vmatpush.msra.mxu0 %v434
        %1481 = vmatpush.msra.mxu0 %v430
        %1482 = vmatpush.msra.mxu0 %v426
        %1483 = vmatpush.msra.mxu0 %v422
        %1484 = vmatmul.f32.gmra.mxu0 %v1333
        %v1485 = vpop.f32.mrf.mxu0
        %v1486 = vadd.f32 %v1352, %v1485
        %1487 = vmatmul.f32.gmra.mxu0 %v1336
        %v1488 = vpop.f32.mrf.mxu0
        %v1489 = vadd.f32 %v1357, %v1488
        %1490 = vmatmul.f32.gmra.mxu0 %v1339
        %v1491 = vpop.f32.mrf.mxu0
        %v1492 = vadd.f32 %v1362, %v1491
        %1493 = vmatmul.f32.gmra.mxu0 %v1342
        %v1494 = vpop.f32.mrf.mxu0
        %v1495 = vadd.f32 %v1367, %v1494
        %1496 = vdwg.mxu0
        %1497 = vmatpush.msra.mxu0 %v1221
        %1498 = vmatpush.msra.mxu0 %v1217
        %1499 = vmatpush.msra.mxu0 %v1213
        %1500 = vmatpush.msra.mxu0 %v1209
        %1501 = vmatpush.msra.mxu0 %v1148
        %1502 = vmatpush.msra.mxu0 %v1144
        %1503 = vmatpush.msra.mxu0 %v1140
        %1504 = vmatpush.msra.mxu0 %v1136
        %1505 = vmatpush.msra.mxu0 %v1056
        %1506 = vmatpush.msra.mxu0 %v1052
        %1507 = vmatpush.msra.mxu0 %v1048
        %1508 = vmatpush.msra.mxu0 %v1044
        %1509 = vmatpush.msra.mxu0 %v963
        %1510 = vmatpush.msra.mxu0 %v959
        %1511 = vmatpush.msra.mxu0 %v955
        %1512 = vmatpush.msra.mxu0 %v951
        %1513 = vmatmul.f32.gmra.mxu0 %v1334
        %v1514 = vpop.f32.mrf.mxu0
        %v1515 = vadd.f32 %v1486, %v1514
        %1516 = vmatmul.f32.gmra.mxu0 %v1337
        %v1517 = vpop.f32.mrf.mxu0
        %v1518 = vadd.f32 %v1489, %v1517
        %1519 = vmatmul.f32.gmra.mxu0 %v1340
        %v1520 = vpop.f32.mrf.mxu0
        %v1521 = vadd.f32 %v1492, %v1520
        %1522 = vmatmul.f32.gmra.mxu0 %v1343
        %v1523 = vpop.f32.mrf.mxu0
        %v1524 = vadd.f32 %v1495, %v1523
        %1525 = vdwg.mxu0
        %1526 = vmatpush.msra.mxu0 0.0
        %1527 = vmatpush.msra.mxu0 0.0
        %1528 = vmatpush.msra.mxu0 0.0
        %1529 = vmatpush.msra.mxu0 0.0
        %1530 = vmatpush.msra.mxu0 0.0
        %1531 = vmatpush.msra.mxu0 0.0
        %1532 = vmatpush.msra.mxu0 0.0
        %1533 = vmatpush.msra.mxu0 0.0
        %1534 = vmatpush.msra.mxu0 0.0
        %1535 = vmatpush.msra.mxu0 0.0
        %1536 = vmatpush.msra.mxu0 0.0
        %1537 = vmatpush.msra.mxu0 0.0
        %1538 = vmatpush.msra.mxu0 %v1314
        %1539 = vmatpush.msra.mxu0 %v1310
        %1540 = vmatpush.msra.mxu0 %v1306
        %1541 = vmatpush.msra.mxu0 %v1302
        %1542 = vmatmul.f32.gmra.mxu0 %v1370
        %v1543 = vpop.f32.mrf.mxu0
        %v1544 = vadd.f32 %v1515, %v1543
        %1545 = vmatmul.f32.gmra.mxu0 %v1373
        %v1546 = vpop.f32.mrf.mxu0
        %v1547 = vadd.f32 %v1518, %v1546
        %1548 = vmatmul.f32.gmra.mxu0 %v1376
        %v1549 = vpop.f32.mrf.mxu0
        %v1550 = vadd.f32 %v1521, %v1549
        %1551 = vmatmul.f32.gmra.mxu0 %v1379
        %v1552 = vpop.f32.mrf.mxu0
        %v1553 = vadd.f32 %v1524, %v1552
        %1554 = vdwg.mxu0
        %1555 = vmatpush.msra.mxu0 %v891
        %1556 = vmatpush.msra.mxu0 %v887
        %1557 = vmatpush.msra.mxu0 %v883
        %1558 = vmatpush.msra.mxu0 %v879
        %1559 = vmatpush.msra.mxu0 %v798
        %1560 = vmatpush.msra.mxu0 %v794
        %1561 = vmatpush.msra.mxu0 %v790
        %1562 = vmatpush.msra.mxu0 %v786
        %1563 = vmatpush.msra.mxu0 %v705
        %1564 = vmatpush.msra.mxu0 %v701
        %1565 = vmatpush.msra.mxu0 %v697
        %1566 = vmatpush.msra.mxu0 %v693
        %1567 = vmatpush.msra.mxu0 %v435
        %1568 = vmatpush.msra.mxu0 %v431
        %1569 = vmatpush.msra.mxu0 %v427
        %1570 = vmatpush.msra.mxu0 %v423
        %1571 = vmatmul.f32.gmra.mxu0 %v1333
        %v1572 = vpop.f32.mrf.mxu0
        %v1573 = vadd.f32 %v1352, %v1572
        %1574 = vmatmul.f32.gmra.mxu0 %v1336
        %v1575 = vpop.f32.mrf.mxu0
        %v1576 = vadd.f32 %v1357, %v1575
        %1577 = vmatmul.f32.gmra.mxu0 %v1339
        %v1578 = vpop.f32.mrf.mxu0
        %v1579 = vadd.f32 %v1362, %v1578
        %1580 = vmatmul.f32.gmra.mxu0 %v1342
        %v1581 = vpop.f32.mrf.mxu0
        %v1582 = vadd.f32 %v1367, %v1581
        %1583 = vdwg.mxu0
        %1584 = vmatpush.msra.mxu0 %v1222
        %1585 = vmatpush.msra.mxu0 %v1218
        %1586 = vmatpush.msra.mxu0 %v1214
        %1587 = vmatpush.msra.mxu0 %v1210
        %1588 = vmatpush.msra.mxu0 %v1149
        %1589 = vmatpush.msra.mxu0 %v1145
        %1590 = vmatpush.msra.mxu0 %v1141
        %1591 = vmatpush.msra.mxu0 %v1137
        %1592 = vmatpush.msra.mxu0 %v1057
        %1593 = vmatpush.msra.mxu0 %v1053
        %1594 = vmatpush.msra.mxu0 %v1049
        %1595 = vmatpush.msra.mxu0 %v1045
        %1596 = vmatpush.msra.mxu0 %v964
        %1597 = vmatpush.msra.mxu0 %v960
        %1598 = vmatpush.msra.mxu0 %v956
        %1599 = vmatpush.msra.mxu0 %v952
        %1600 = vmatmul.f32.gmra.mxu0 %v1334
        %v1601 = vpop.f32.mrf.mxu0
        %v1602 = vadd.f32 %v1573, %v1601
        %1603 = vmatmul.f32.gmra.mxu0 %v1337
        %v1604 = vpop.f32.mrf.mxu0
        %v1605 = vadd.f32 %v1576, %v1604
        %1606 = vmatmul.f32.gmra.mxu0 %v1340
        %v1607 = vpop.f32.mrf.mxu0
        %v1608 = vadd.f32 %v1579, %v1607
        %1609 = vmatmul.f32.gmra.mxu0 %v1343
        %v1610 = vpop.f32.mrf.mxu0
        %v1611 = vadd.f32 %v1582, %v1610
        %1612 = vdwg.mxu0
        %1613 = vmatpush.msra.mxu0 0.0
        %1614 = vmatpush.msra.mxu0 0.0
        %1615 = vmatpush.msra.mxu0 0.0
        %1616 = vmatpush.msra.mxu0 0.0
        %1617 = vmatpush.msra.mxu0 0.0
        %1618 = vmatpush.msra.mxu0 0.0
        %1619 = vmatpush.msra.mxu0 0.0
        %1620 = vmatpush.msra.mxu0 0.0
        %1621 = vmatpush.msra.mxu0 0.0
        %1622 = vmatpush.msra.mxu0 0.0
        %1623 = vmatpush.msra.mxu0 0.0
        %1624 = vmatpush.msra.mxu0 0.0
        %1625 = vmatpush.msra.mxu0 %v1315
        %1626 = vmatpush.msra.mxu0 %v1311
        %1627 = vmatpush.msra.mxu0 %v1307
        %1628 = vmatpush.msra.mxu0 %v1303
        %1629 = vmatmul.f32.gmra.mxu0 %v1370
        %v1630 = vpop.f32.mrf.mxu0
        %v1631 = vadd.f32 %v1602, %v1630
        %1632 = vmatmul.f32.gmra.mxu0 %v1373
        %v1633 = vpop.f32.mrf.mxu0
        %v1634 = vadd.f32 %v1605, %v1633
        %1635 = vmatmul.f32.gmra.mxu0 %v1376
        %v1636 = vpop.f32.mrf.mxu0
        %v1637 = vadd.f32 %v1608, %v1636
        %1638 = vmatmul.f32.gmra.mxu0 %v1379
        %v1639 = vpop.f32.mrf.mxu0
        %v1640 = vadd.f32 %v1611, %v1639
        %1641 = vdwg.mxu0
        %1642 = vmatpush.msra.mxu0 %v892
        %1643 = vmatpush.msra.mxu0 %v888
        %1644 = vmatpush.msra.mxu0 %v884
        %1645 = vmatpush.msra.mxu0 %v880
        %1646 = vmatpush.msra.mxu0 %v799
        %1647 = vmatpush.msra.mxu0 %v795
        %1648 = vmatpush.msra.mxu0 %v791
        %1649 = vmatpush.msra.mxu0 %v787
        %1650 = vmatpush.msra.mxu0 %v706
        %1651 = vmatpush.msra.mxu0 %v702
        %1652 = vmatpush.msra.mxu0 %v698
        %1653 = vmatpush.msra.mxu0 %v694
        %1654 = vmatpush.msra.mxu0 %v436
        %1655 = vmatpush.msra.mxu0 %v432
        %1656 = vmatpush.msra.mxu0 %v428
        %1657 = vmatpush.msra.mxu0 %v424
        %1658 = vmatmul.f32.gmra.mxu0 %v1333
        %v1659 = vpop.f32.mrf.mxu0
        %v1660 = vadd.f32 %v1352, %v1659
        %1661 = vmatmul.f32.gmra.mxu0 %v1336
        %v1662 = vpop.f32.mrf.mxu0
        %v1663 = vadd.f32 %v1357, %v1662
        %1664 = vmatmul.f32.gmra.mxu0 %v1339
        %v1665 = vpop.f32.mrf.mxu0
        %v1666 = vadd.f32 %v1362, %v1665
        %1667 = vmatmul.f32.gmra.mxu0 %v1342
        %v1668 = vpop.f32.mrf.mxu0
        %v1669 = vadd.f32 %v1367, %v1668
        %1670 = vdwg.mxu0
        %1671 = vmatpush.msra.mxu0 %v1223
        %1672 = vmatpush.msra.mxu0 %v1219
        %1673 = vmatpush.msra.mxu0 %v1215
        %1674 = vmatpush.msra.mxu0 %v1211
        %1675 = vmatpush.msra.mxu0 %v1150
        %1676 = vmatpush.msra.mxu0 %v1146
        %1677 = vmatpush.msra.mxu0 %v1142
        %1678 = vmatpush.msra.mxu0 %v1138
        %1679 = vmatpush.msra.mxu0 %v1058
        %1680 = vmatpush.msra.mxu0 %v1054
        %1681 = vmatpush.msra.mxu0 %v1050
        %1682 = vmatpush.msra.mxu0 %v1046
        %1683 = vmatpush.msra.mxu0 %v965
        %1684 = vmatpush.msra.mxu0 %v961
        %1685 = vmatpush.msra.mxu0 %v957
        %1686 = vmatpush.msra.mxu0 %v953
        %1687 = vmatmul.f32.gmra.mxu0 %v1334
        %v1688 = vpop.f32.mrf.mxu0
        %v1689 = vadd.f32 %v1660, %v1688
        %1690 = vmatmul.f32.gmra.mxu0 %v1337
        %v1691 = vpop.f32.mrf.mxu0
        %v1692 = vadd.f32 %v1663, %v1691
        %1693 = vmatmul.f32.gmra.mxu0 %v1340
        %v1694 = vpop.f32.mrf.mxu0
        %v1695 = vadd.f32 %v1666, %v1694
        %1696 = vmatmul.f32.gmra.mxu0 %v1343
        %v1697 = vpop.f32.mrf.mxu0
        %v1698 = vadd.f32 %v1669, %v1697
        %1699 = vdwg.mxu0
        %1700 = vmatpush.msra.mxu0 0.0
        %1701 = vmatpush.msra.mxu0 0.0
        %1702 = vmatpush.msra.mxu0 0.0
        %1703 = vmatpush.msra.mxu0 0.0
        %1704 = vmatpush.msra.mxu0 0.0
        %1705 = vmatpush.msra.mxu0 0.0
        %1706 = vmatpush.msra.mxu0 0.0
        %1707 = vmatpush.msra.mxu0 0.0
        %1708 = vmatpush.msra.mxu0 0.0
        %1709 = vmatpush.msra.mxu0 0.0
        %1710 = vmatpush.msra.mxu0 0.0
        %1711 = vmatpush.msra.mxu0 0.0
        %1712 = vmatpush.msra.mxu0 %v1316
        %1713 = vmatpush.msra.mxu0 %v1312
        %1714 = vmatpush.msra.mxu0 %v1308
        %1715 = vmatpush.msra.mxu0 %v1304
        %1716 = vmatmul.f32.gmra.mxu0 %v1370
        %v1717 = vpop.f32.mrf.mxu0
        %v1718 = vadd.f32 %v1689, %v1717
        %1719 = vmatmul.f32.gmra.mxu0 %v1373
        %v1720 = vpop.f32.mrf.mxu0
        %v1721 = vadd.f32 %v1692, %v1720
        %1722 = vmatmul.f32.gmra.mxu0 %v1376
        %v1723 = vpop.f32.mrf.mxu0
        %v1724 = vadd.f32 %v1695, %v1723
        %1725 = vmatmul.f32.gmra.mxu0 %v1379
        %v1726 = vpop.f32.mrf.mxu0
        %v1727 = vadd.f32 %v1698, %v1726
        %1728 = vdwg.mxu0
        %v1729 = vmax.f32 %v1457, 0.0
        %v1730 = vmax.f32 %v1544, 0.0
        %v1731 = vmax.f32 %v1631, 0.0
        %v1732 = vmax.f32 %v1718, 0.0
        %v1733 = vmax.f32 %v1460, 0.0
        %v1734 = vmax.f32 %v1547, 0.0
        %v1735 = vmax.f32 %v1634, 0.0
        %v1736 = vmax.f32 %v1721, 0.0
        %v1737 = vmax.f32 %v1463, 0.0
        %v1738 = vmax.f32 %v1550, 0.0
        %v1739 = vmax.f32 %v1637, 0.0
        %v1740 = vmax.f32 %v1724, 0.0
        %v1741 = vmax.f32 %v1466, 0.0
        %v1742 = vmax.f32 %v1553, 0.0
        %v1743 = vmax.f32 %v1640, 0.0
        %v1744 = vmax.f32 %v1727, 0.0
        %v1745 = vld [vmem:[%s4] sm:$0xff]
        %v1746 = vld [vmem:[%s4 + $0x8] sm:$0xff]
        %v1747 = vld [vmem:[%s4 + $0x10] sm:$0xff]
        %v1748 = vld [vmem:[%s4 + $0x18] sm:$0xff]
        %v1749 = vld [vmem:[%s4 + $0x20] sm:$0x1f]
        %v1750 = vld [vmem:[%s5] sm:$0xff]
        %v1751 = vld [vmem:[%s5 + $0x8] sm:$0xff]
        %v1752 = vld [vmem:[%s5 + $0x10] sm:$0xff]
        %v1753 = vld [vmem:[%s5 + $0x18] sm:$0xff]
        %v1754 = vld [vmem:[%s5 + $0x20] sm:$0x1f]
        %1756 = vset.pattern.permute.xlu0 0
        %1757 = vperm.xlu0 %1756, %v1750
        %v1758 = vpop.permute.xlu0 %1757
        %1761 = vset.pattern.permute.xlu0 0
        %1762 = vperm.xlu0 %1761, %v1751
        %v1763 = vpop.permute.xlu0 %1762
        %1766 = vset.pattern.permute.xlu0 0
        %1767 = vperm.xlu0 %1766, %v1752
        %v1768 = vpop.permute.xlu0 %1767
        %1771 = vset.pattern.permute.xlu0 0
        %1772 = vperm.xlu0 %1771, %v1753
        %v1773 = vpop.permute.xlu0 %1772
        %1776 = vset.pattern.permute.xlu0 0
        %1777 = vperm.xlu0 %1776, %v1754
        %v1778 = vpop.permute.xlu0 %1777
        %v1781 = vsel %vm502, %v1745, 0
        %v1784 = vsel %vm502, %v1746, 0
        %v1787 = vsel %vm502, %v1747, 0
        %v1790 = vsel %vm502, %v1748, 0
        %v1793 = vsel %vm502, %v1749, 0
        %1795 = vmatpush.msra.mxu0 0.0
        %1796 = vmatpush.msra.mxu0 0.0
        %1797 = vmatpush.msra.mxu0 0.0
        %1798 = vmatpush.msra.mxu0 0.0
        %1799 = vmatpush.msra.mxu0 0.0
        %1800 = vmatpush.msra.mxu0 0.0
        %1801 = vmatpush.msra.mxu0 0.0
        %1802 = vmatpush.msra.mxu0 0.0
        %1803 = vmatpush.msra.mxu0 0.0
        %1804 = vmatpush.msra.mxu0 0.0
        %1805 = vmatpush.msra.mxu0 0.0
        %1806 = vmatpush.msra.mxu0 0.0
        %1807 = vmatpush.msra.mxu0 %v1741
        %1808 = vmatpush.msra.mxu0 %v1737
        %1809 = vmatpush.msra.mxu0 %v1733
        %1810 = vmatpush.msra.mxu0 %v1729
        %1811 = vmatmul.f32.gmra.mxu0 %v1781
        %v1812 = vpop.f32.mrf.mxu0
        %v1813 = vadd.f32 %v1758, %v1812
        %1814 = vmatmul.f32.gmra.mxu0 %v1784
        %v1815 = vpop.f32.mrf.mxu0
        %v1816 = vadd.f32 %v1763, %v1815
        %1817 = vmatmul.f32.gmra.mxu0 %v1787
        %v1818 = vpop.f32.mrf.mxu0
        %v1819 = vadd.f32 %v1768, %v1818
        %1820 = vmatmul.f32.gmra.mxu0 %v1790
        %v1821 = vpop.f32.mrf.mxu0
        %v1822 = vadd.f32 %v1773, %v1821
        %1823 = vmatmul.f32.gmra.mxu0 %v1793
        %v1824 = vpop.f32.mrf.mxu0
        %v1825 = vadd.f32 %v1778, %v1824
        %1826 = vdwg.mxu0
        %1827 = vmatpush.msra.mxu0 0.0
        %1828 = vmatpush.msra.mxu0 0.0
        %1829 = vmatpush.msra.mxu0 0.0
        %1830 = vmatpush.msra.mxu0 0.0
        %1831 = vmatpush.msra.mxu0 0.0
        %1832 = vmatpush.msra.mxu0 0.0
        %1833 = vmatpush.msra.mxu0 0.0
        %1834 = vmatpush.msra.mxu0 0.0
        %1835 = vmatpush.msra.mxu0 0.0
        %1836 = vmatpush.msra.mxu0 0.0
        %1837 = vmatpush.msra.mxu0 0.0
        %1838 = vmatpush.msra.mxu0 0.0
        %1839 = vmatpush.msra.mxu0 %v1742
        %1840 = vmatpush.msra.mxu0 %v1738
        %1841 = vmatpush.msra.mxu0 %v1734
        %1842 = vmatpush.msra.mxu0 %v1730
        %1843 = vmatmul.f32.gmra.mxu0 %v1781
        %v1844 = vpop.f32.mrf.mxu0
        %v1845 = vadd.f32 %v1758, %v1844
        %1846 = vmatmul.f32.gmra.mxu0 %v1784
        %v1847 = vpop.f32.mrf.mxu0
        %v1848 = vadd.f32 %v1763, %v1847
        %1849 = vmatmul.f32.gmra.mxu0 %v1787
        %v1850 = vpop.f32.mrf.mxu0
        %v1851 = vadd.f32 %v1768, %v1850
        %1852 = vmatmul.f32.gmra.mxu0 %v1790
        %v1853 = vpop.f32.mrf.mxu0
        %v1854 = vadd.f32 %v1773, %v1853
        %1855 = vmatmul.f32.gmra.mxu0 %v1793
        %v1856 = vpop.f32.mrf.mxu0
        %v1857 = vadd.f32 %v1778, %v1856
        %1858 = vdwg.mxu0
        %1859 = vmatpush.msra.mxu0 0.0
        %1860 = vmatpush.msra.mxu0 0.0
        %1861 = vmatpush.msra.mxu0 0.0
        %1862 = vmatpush.msra.mxu0 0.0
        %1863 = vmatpush.msra.mxu0 0.0
        %1864 = vmatpush.msra.mxu0 0.0
        %1865 = vmatpush.msra.mxu0 0.0
        %1866 = vmatpush.msra.mxu0 0.0
        %1867 = vmatpush.msra.mxu0 0.0
        %1868 = vmatpush.msra.mxu0 0.0
        %1869 = vmatpush.msra.mxu0 0.0
        %1870 = vmatpush.msra.mxu0 0.0
        %1871 = vmatpush.msra.mxu0 %v1743
        %1872 = vmatpush.msra.mxu0 %v1739
        %1873 = vmatpush.msra.mxu0 %v1735
        %1874 = vmatpush.msra.mxu0 %v1731
        %1875 = vmatmul.f32.gmra.mxu0 %v1781
        %v1876 = vpop.f32.mrf.mxu0
        %v1877 = vadd.f32 %v1758, %v1876
        %1878 = vmatmul.f32.gmra.mxu0 %v1784
        %v1879 = vpop.f32.mrf.mxu0
        %v1880 = vadd.f32 %v1763, %v1879
        %1881 = vmatmul.f32.gmra.mxu0 %v1787
        %v1882 = vpop.f32.mrf.mxu0
        %v1883 = vadd.f32 %v1768, %v1882
        %1884 = vmatmul.f32.gmra.mxu0 %v1790
        %v1885 = vpop.f32.mrf.mxu0
        %v1886 = vadd.f32 %v1773, %v1885
        %1887 = vmatmul.f32.gmra.mxu0 %v1793
        %v1888 = vpop.f32.mrf.mxu0
        %v1889 = vadd.f32 %v1778, %v1888
        %1890 = vdwg.mxu0
        %1891 = vmatpush.msra.mxu0 0.0
        %1892 = vmatpush.msra.mxu0 0.0
        %1893 = vmatpush.msra.mxu0 0.0
        %1894 = vmatpush.msra.mxu0 0.0
        %1895 = vmatpush.msra.mxu0 0.0
        %1896 = vmatpush.msra.mxu0 0.0
        %1897 = vmatpush.msra.mxu0 0.0
        %1898 = vmatpush.msra.mxu0 0.0
        %1899 = vmatpush.msra.mxu0 0.0
        %1900 = vmatpush.msra.mxu0 0.0
        %1901 = vmatpush.msra.mxu0 0.0
        %1902 = vmatpush.msra.mxu0 0.0
        %1903 = vmatpush.msra.mxu0 %v1744
        %1904 = vmatpush.msra.mxu0 %v1740
        %1905 = vmatpush.msra.mxu0 %v1736
        %1906 = vmatpush.msra.mxu0 %v1732
        %1907 = vmatmul.f32.gmra.mxu0 %v1781
        %v1908 = vpop.f32.mrf.mxu0
        %v1909 = vadd.f32 %v1758, %v1908
        %1910 = vmatmul.f32.gmra.mxu0 %v1784
        %v1911 = vpop.f32.mrf.mxu0
        %v1912 = vadd.f32 %v1763, %v1911
        %1913 = vmatmul.f32.gmra.mxu0 %v1787
        %v1914 = vpop.f32.mrf.mxu0
        %v1915 = vadd.f32 %v1768, %v1914
        %1916 = vmatmul.f32.gmra.mxu0 %v1790
        %v1917 = vpop.f32.mrf.mxu0
        %v1918 = vadd.f32 %v1773, %v1917
        %1919 = vmatmul.f32.gmra.mxu0 %v1793
        %v1920 = vpop.f32.mrf.mxu0
        %v1921 = vadd.f32 %v1778, %v1920
        %1922 = vdwg.mxu0
        %s1923 = sld [smem:[#allocation2]]
        %v1924 = vstv %s1923
        %v1925 = vmul.f32 %v1813, %v1924
        %v1926 = vmul.f32 %v1845, %v1924
        %v1927 = vmul.f32 %v1877, %v1924
        %v1928 = vmul.f32 %v1909, %v1924
        %v1929 = vmul.f32 %v1816, %v1924
        %v1930 = vmul.f32 %v1848, %v1924
        %v1931 = vmul.f32 %v1880, %v1924
        %v1932 = vmul.f32 %v1912, %v1924
        %v1933 = vmul.f32 %v1819, %v1924
        %v1934 = vmul.f32 %v1851, %v1924
        %v1935 = vmul.f32 %v1883, %v1924
        %v1936 = vmul.f32 %v1915, %v1924
        %v1937 = vmul.f32 %v1822, %v1924
        %v1938 = vmul.f32 %v1854, %v1924
        %v1939 = vmul.f32 %v1886, %v1924
        %v1940 = vmul.f32 %v1918, %v1924
        %v1941 = vmul.f32 %v1825, %v1924
        %v1942 = vmul.f32 %v1857, %v1924
        %v1943 = vmul.f32 %v1889, %v1924
        %v1944 = vmul.f32 %v1921, %v1924
        %v1945 = vmax.f32 %v1925, 0.0
        %v1946 = vmax.f32 %v1926, 0.0
        %v1947 = vmax.f32 %v1927, 0.0
        %v1948 = vmax.f32 %v1928, 0.0
        %v1949 = vmax.f32 %v1929, 0.0
        %v1950 = vmax.f32 %v1930, 0.0
        %v1951 = vmax.f32 %v1931, 0.0
        %v1952 = vmax.f32 %v1932, 0.0
        %v1953 = vmax.f32 %v1933, 0.0
        %v1954 = vmax.f32 %v1934, 0.0
        %v1955 = vmax.f32 %v1935, 0.0
        %v1956 = vmax.f32 %v1936, 0.0
        %v1957 = vmax.f32 %v1937, 0.0
        %v1958 = vmax.f32 %v1938, 0.0
        %v1959 = vmax.f32 %v1939, 0.0
        %v1960 = vmax.f32 %v1940, 0.0
        %v1961 = vmax.f32 %v1941, 0.0
        %v1962 = vmax.f32 %v1942, 0.0
        %v1963 = vmax.f32 %v1943, 0.0
        %v1964 = vmax.f32 %v1944, 0.0
        %v1965 = vmul.f32 %v1945, 8.0
        %v1966 = vmul.f32 %v1946, 8.0
        %v1967 = vmul.f32 %v1947, 8.0
        %v1968 = vmul.f32 %v1948, 8.0
        %v1969 = vmul.f32 %v1949, 8.0
        %v1970 = vmul.f32 %v1950, 8.0
        %v1971 = vmul.f32 %v1951, 8.0
        %v1972 = vmul.f32 %v1952, 8.0
        %v1973 = vmul.f32 %v1953, 8.0
        %v1974 = vmul.f32 %v1954, 8.0
        %v1975 = vmul.f32 %v1955, 8.0
        %v1976 = vmul.f32 %v1956, 8.0
        %v1977 = vmul.f32 %v1957, 8.0
        %v1978 = vmul.f32 %v1958, 8.0
        %v1979 = vmul.f32 %v1959, 8.0
        %v1980 = vmul.f32 %v1960, 8.0
        %v1981 = vmul.f32 %v1961, 8.0
        %v1982 = vmul.f32 %v1962, 8.0
        %v1983 = vmul.f32 %v1963, 8.0
        %v1984 = vmul.f32 %v1964, 8.0
        %v1985 = vlaneseq
        %v1986 = vshrl.u32 %v1985, 7
        %v1987 = vadd.s32 %v1986, 8
        %v1988 = vadd.s32 %v1986, 16
        %v1989 = vadd.s32 %v1986, 24
        %v1990 = vadd.s32 %v1986, 32
        %vm1991 = vcmp.ge.s32.totalorder %v1986, 33
        %vm1992 = vcmp.ge.s32.totalorder %v1987, 33
        %vm1993 = vcmp.ge.s32.totalorder %v1988, 33
        %vm1994 = vcmp.ge.s32.totalorder %v1989, 33
        %vm1995 = vcmp.ge.s32.totalorder %v1990, 33
        %v1996 = vsel %vm1991, %v1965, %v1813
        %v1997 = vsel %vm1991, %v1966, %v1845
        %v1998 = vsel %vm1991, %v1967, %v1877
        %v1999 = vsel %vm1991, %v1968, %v1909
        %v2000 = vsel %vm1992, %v1969, %v1816
        %v2001 = vsel %vm1992, %v1970, %v1848
        %v2002 = vsel %vm1992, %v1971, %v1880
        %v2003 = vsel %vm1992, %v1972, %v1912
        %v2004 = vsel %vm1993, %v1973, %v1819
        %v2005 = vsel %vm1993, %v1974, %v1851
        %v2006 = vsel %vm1993, %v1975, %v1883
        %v2007 = vsel %vm1993, %v1976, %v1915
        %v2008 = vsel %vm1994, %v1977, %v1822
        %v2009 = vsel %vm1994, %v1978, %v1854
        %v2010 = vsel %vm1994, %v1979, %v1886
        %v2011 = vsel %vm1994, %v1980, %v1918
        %v2012 = vsel %vm1995, %v1981, %v1825
        %v2013 = vsel %vm1995, %v1982, %v1857
        %v2014 = vsel %vm1995, %v1983, %v1889
        %v2015 = vsel %vm1995, %v1984, %v1921
        %2016 = vst [vmem:[%s301] sm:$0xff] %v1996
        %2017 = vst [vmem:[%s301 + $0x8] sm:$0xff] %v1997
        %2018 = vst [vmem:[%s301 + $0x10] sm:$0xff] %v1998
        %2019 = vst [vmem:[%s301 + $0x18] sm:$0xff] %v1999
        %2020 = vst [vmem:[%s301 + $0x20] sm:$0xff] %v2000
        %2021 = vst [vmem:[%s301 + $0x28] sm:$0xff] %v2001
        %2022 = vst [vmem:[%s301 + $0x30] sm:$0xff] %v2002
        %2023 = vst [vmem:[%s301 + $0x38] sm:$0xff] %v2003
        %2024 = vst [vmem:[%s301 + $0x40] sm:$0xff] %v2004
        %2025 = vst [vmem:[%s301 + $0x48] sm:$0xff] %v2005
        %2026 = vst [vmem:[%s301 + $0x50] sm:$0xff] %v2006
        %2027 = vst [vmem:[%s301 + $0x58] sm:$0xff] %v2007
        %2028 = vst [vmem:[%s301 + $0x60] sm:$0xff] %v2008
        %2029 = vst [vmem:[%s301 + $0x68] sm:$0xff] %v2009
        %2030 = vst [vmem:[%s301 + $0x70] sm:$0xff] %v2010
        %2031 = vst [vmem:[%s301 + $0x78] sm:$0xff] %v2011
        %2032 = vst [vmem:[%s301 + $0x80] sm:$0x1f] %v2012
        %2033 = vst [vmem:[%s301 + $0x88] sm:$0x1f] %v2013
        %2034 = vst [vmem:[%s301 + $0x90] sm:$0x1f] %v2014
        %2035 = vst [vmem:[%s301 + $0x98] sm:$0x1f] %v2015
        %p2036 = scmp.lt.s32.totalorder %s22, 1
        %s2037 = scalar_select %p2036, %s22, 1
        %s2038 = smul.addr %s2037, 20
        %s2039 = smul.addr %s2038, 8
        %s2040 = scalar_lea.vmem %s7, %s2039
        // Predicated region
        $region53: #{tpu_custom_call.1} parent=47 // pred_check
          %p2041 = pneg %p192
        $region54: #{tpu_custom_call.1} parent=47 // pred_check_branch
          %2043 = sbr.rel (%p2041) target = $region56
        $region55: #{tpu_custom_call.1} parent=47 // pred_region
          _
        $region56: #{tpu_custom_call.1} parent=47 // pred_fallthru
          _
      $region48: #{tpu_custom_call.1} parent=5 // pred_fallthru
        _
      %p2044 = scmp.le.s32.totalorder 2, %s17
      // Predicated region
      $region57: #{tpu_custom_call.1} parent=5 // pred_check
        %p2045 = pneg %p2044
      $region58: #{tpu_custom_call.1} parent=5 // pred_check_branch
        %2047 = sbr.rel (%p2045) target = $region60
      $region59: #{tpu_custom_call.1} parent=5 // pred_region
        %s2048 = ssub.s32 %s17, 2
        // Predicated region
        $region61: #{tpu_custom_call.1} parent=59 // pred_check
          %p2049 = pneg %p198
        $region62: #{tpu_custom_call.1} parent=59 // pred_check_branch
          %2051 = sbr.rel (%p2049) target = $region64
        $region63: #{tpu_custom_call.1} parent=59 // pred_region
          %p2052 = scmp.lt.s32.totalorder %s23, 1
          %s2053 = scalar_select %p2052, %s23, 1
          %s2054 = smul.addr %s2053, 20
          %s2055 = smul.addr %s2054, 8
          %s2056 = scalar_lea.vmem %s7, %s2055
        $region64: #{tpu_custom_call.1} parent=59 // pred_fallthru
          _
      $region60: #{tpu_custom_call.1} parent=5 // pred_fallthru
        _
    $region6: #{tpu_custom_call.1} parent=1 // loop_footer
      %s21 = sadd.s32 1, %s17
    $region7: #{tpu_custom_call.1} parent=1 // loop_footer_branch
      %16 = sbr.rel target = $region3
    $region8: #{tpu_custom_call.1} parent=1 // loop_exit
      _
    %2057 = vsyncpa [#allocation4], 1
    %s2058 = scalar_lea.sflag [#allocation4], 1
    %2059 = vsyncpa %s2058, 1

</llo_original>
